<compile_context>
chip_gen: v7x
topology: tpu7x:2x2x1
jax: 0.10.0
libtpu: 0.0.40
codegen_flags: <defaults>
</compile_context>

<pallas_src>
import math

import jax
import jax.numpy as jnp
from jax.experimental import pallas as pl
from jax.experimental.pallas import tpu as pltpu

# ---- hyper-params ----------------------------------------------------------
B = 2          # batch
S = 8          # sequence length
D_MODEL = 32
D_K = 8
D_V = 8
N_HEADS = 4
D_FF = 64
LN_EPS = 1e-5
SCALE = 1.0 / math.sqrt(D_K)


def _layer_norm(x, gamma, beta):
    # PyTorch nn.LayerNorm: biased variance, eps inside sqrt; rsqrt goes to the EUP.
    mean = jnp.mean(x, axis=-1, keepdims=True)
    var = jnp.mean((x - mean) ** 2, axis=-1, keepdims=True)
    return (x - mean) * jax.lax.rsqrt(var + LN_EPS) * gamma + beta


# ---- kernel -----------------------------------------------------------------
def encoder_layer_kernel(x_ref, amask_ref, wh_ref, bh_ref, wffn_ref, bmisc_ref,
                         out_ref, attn_ref):
    # One grid step == one batch element.
    x = x_ref[0]                          # (S, d_model)
    amask = amask_ref[0]                  # (S, S) additive mask: 0.0 or -1e9

    # --- fused Q / K / (V@Wo) projections: ONE batched matmul over 3*H heads ---
    w_h = wh_ref[...]                     # (3H, d_model, d_model)  [Wq_h|0], [Wk_h|0], Wvo_h
    b_h = bh_ref[...]                     # (3H, 1, d_model)
    xb = jnp.broadcast_to(x[None], (3 * N_HEADS, S, D_MODEL))
    proj = jnp.einsum("hsd,hdm->hsm", xb, w_h,
                      preferred_element_type=jnp.float32) + b_h
    q = proj[0:N_HEADS]                   # (H, S, d_model) — only lanes [0:d_k] nonzero
    k = proj[N_HEADS:2 * N_HEADS]         # (H, S, d_model) — padded lanes are exact zeros
    xv = proj[2 * N_HEADS:3 * N_HEADS]    # (H, S, d_model) = x @ Wvo_h + bvo_h

    # --- scaled dot-product attention, all heads batched (padded lanes add exact 0) ---
    scores = jnp.einsum("hqd,hkd->hqk", q, k,
                        preferred_element_type=jnp.float32) * SCALE + amask[None]
    m = jnp.max(scores, axis=-1, keepdims=True)
    e = jnp.exp(scores - m)
    attn = e / jnp.sum(e, axis=-1, keepdims=True)   # exact div: attn is checked at 1e-5
    attn_ref[0] = attn                              # single store per batch (no head loop)

    # --- context + folded output projection + residual + LayerNorm ---
    bm = bmisc_ref[...]                             # (7, d_ff)
    bo = bm[0:1, 0:D_MODEL]
    g1, be1 = bm[1:2, 0:D_MODEL], bm[2:3, 0:D_MODEL]
    b1 = bm[3:4, :]
    b2 = bm[4:5, 0:D_MODEL]
    g2, be2 = bm[5:6, 0:D_MODEL], bm[6:7, 0:D_MODEL]

    ctx = jnp.einsum("hqk,hkm->hqm", attn, xv, preferred_element_type=jnp.float32)
    attn_out = jnp.sum(ctx, axis=0) + bo            # == concat_h(ctx_h) @ Wo + bo
    y = _layer_norm(attn_out + x, g1, be1)          # (S, d_model)

    # --- position-wise FFN (Conv1d k=1 == pointwise linear) + residual + LayerNorm ---
    w1 = wffn_ref[0:D_MODEL, :]                     # (d_model, d_ff)
    w2 = wffn_ref[D_MODEL:D_MODEL + D_FF, 0:D_MODEL]  # (d_ff, d_model)
    h1 = jnp.maximum(jnp.dot(y, w1, preferred_element_type=jnp.float32) + b1, 0.0)
    h2 = jnp.dot(h1, w2, preferred_element_type=jnp.float32) + b2
    out_ref[0] = _layer_norm(h2 + y, g2, be2)


# ---- wrapper-side parameter packing (pure layout plumbing, runs in XLA) -----
def pack_params(params):
    (wq, bq, wk, bk, wv, bv, wo, bo, g1, be1, w1, b1, w2, b2, g2, be2) = params
    H, Dm, Dk, Dv, Dff = N_HEADS, D_MODEL, D_K, D_V, D_FF

    # head-major views of the projection weights
    wq_h = wq.reshape(Dm, H, Dk).transpose(1, 0, 2)            # (H, Dm, Dk)
    wk_h = wk.reshape(Dm, H, Dk).transpose(1, 0, 2)
    wv_h = wv.reshape(Dm, H, Dv).transpose(1, 0, 2)            # (H, Dm, Dv)
    wo_h = wo.reshape(H, Dv, Dm)                               # (H, Dv, Dm)
    wvo_h = jnp.einsum("hdv,hvm->hdm", wv_h, wo_h)             # folded V@Wo: (H, Dm, Dm)
    bq_h = bq.reshape(H, 1, Dk)
    bk_h = bk.reshape(H, 1, Dk)
    bvo_h = jnp.einsum("hiv,hvm->him", bv.reshape(H, 1, Dv), wo_h)  # (H, 1, Dm)

    padw = lambda a: jnp.pad(a, ((0, 0), (0, 0), (0, Dm - Dk)))  # zero-pad head dim 8 -> 32
    w_heads = jnp.concatenate([padw(wq_h), padw(wk_h), wvo_h], axis=0)   # (3H, Dm, Dm)
    b_heads = jnp.concatenate([padw(bq_h), padw(bk_h), bvo_h], axis=0)   # (3H, 1, Dm)

    # FFN weights packed: rows [0:Dm] = W1, rows [Dm:Dm+Dff] = [W2 | 0]
    w_ffn = jnp.concatenate([w1, jnp.pad(w2, ((0, 0), (0, Dff - Dm)))], axis=0)  # (Dm+Dff, Dff)

    # misc bias / LayerNorm vectors, one row each, zero-padded to d_ff lanes
    pad_row = lambda v: jnp.pad(v.reshape(1, -1), ((0, 0), (0, Dff - v.size)))
    b_misc = jnp.concatenate(
        [pad_row(bo), pad_row(g1), pad_row(be1), b1.reshape(1, Dff),
         pad_row(b2), pad_row(g2), pad_row(be2)], axis=0)                        # (7, Dff)

    return w_heads, b_heads, w_ffn, b_misc


@jax.jit
def encoder_layer(x, mask_bool, params):
    """x: (B, S, d_model) f32; mask_bool: (B, S, S) bool (True == masked)."""
    w_heads, b_heads, w_ffn, b_misc = pack_params(params)
    add_mask = jnp.where(mask_bool, jnp.float32(-1e9), jnp.float32(0.0))

    # advisory cost hint so XLA schedules this sub-microsecond call tightly
    flops = 2 * B * S * (3 * N_HEADS * D_MODEL * D_MODEL      # fused projections
                         + 2 * N_HEADS * S * D_MODEL          # scores + context
                         + 2 * D_MODEL * D_FF)                # FFN
    transcendentals = B * N_HEADS * S * S + 2 * B * S
    bytes_accessed = 4 * (x.size + add_mask.size + w_heads.size + b_heads.size
                          + w_ffn.size + b_misc.size
                          + B * S * D_MODEL + B * N_HEADS * S * S)

    out, attn = pl.pallas_call(
        encoder_layer_kernel,
        grid=(B,),
        in_specs=[
            pl.BlockSpec((1, S, D_MODEL), lambda b: (b, 0, 0)),                  # x
            pl.BlockSpec((1, S, S), lambda b: (b, 0, 0)),                        # additive mask
            pl.BlockSpec((3 * N_HEADS, D_MODEL, D_MODEL), lambda b: (0, 0, 0)),  # w_heads
            pl.BlockSpec((3 * N_HEADS, 1, D_MODEL), lambda b: (0, 0, 0)),        # b_heads
            pl.BlockSpec((D_MODEL + D_FF, D_FF), lambda b: (0, 0)),              # w_ffn
            pl.BlockSpec((7, D_FF), lambda b: (0, 0)),                           # b_misc
        ],
        out_specs=[
            pl.BlockSpec((1, S, D_MODEL), lambda b: (b, 0, 0)),
            pl.BlockSpec((1, N_HEADS, S, S), lambda b: (b, 0, 0, 0)),
        ],
        out_shape=[
            jax.ShapeDtypeStruct((B, S, D_MODEL), jnp.float32),
            jax.ShapeDtypeStruct((B, N_HEADS, S, S), jnp.float32),
        ],
        compiler_params=pltpu.CompilerParams(dimension_semantics=("parallel",)),
        cost_estimate=pl.CostEstimate(flops=flops, transcendentals=transcendentals,
                                      bytes_accessed=bytes_accessed),
    )(x, add_mask, w_heads, b_heads, w_ffn, b_misc)
    return out, attn


# ---- pure-JAX reference (mirrors the PyTorch forward with the ORIGINAL params) ----
def encoder_layer_ref(x, mask_bool, params):
    (wq, bq, wk, bk, wv, bv, wo, bo, g1, be1, w1, b1, w2, b2, g2, be2) = params

    def ln(z, g, bta):
        mu = jnp.mean(z, axis=-1, keepdims=True)
        var = jnp.mean((z - mu) ** 2, axis=-1, keepdims=True)
        return (z - mu) / jnp.sqrt(var + LN_EPS) * g[0] + bta[0]

    q = (x @ wq + bq[0]).reshape(B, S, N_HEADS, D_K).transpose(0, 2, 1, 3)
    k = (x @ wk + bk[0]).reshape(B, S, N_HEADS, D_K).transpose(0, 2, 1, 3)
    v = (x @ wv + bv[0]).reshape(B, S, N_HEADS, D_V).transpose(0, 2, 1, 3)

    scores = jnp.einsum("bhqd,bhkd->bhqk", q, k) / math.sqrt(D_K)
    scores = jnp.where(mask_bool[:, None, :, :], -1e9, scores)
    attn = jax.nn.softmax(scores, axis=-1)
    ctx = jnp.einsum("bhqk,bhkd->bhqd", attn, v)
    ctx = ctx.transpose(0, 2, 1, 3).reshape(B, S, N_HEADS * D_V)
    y = ln(ctx @ wo + bo[0] + x, g1, be1)

    h1 = jnp.maximum(y @ w1 + b1[0], 0.0)
    h2 = h1 @ w2 + b2[0]
    return ln(h2 + y, g2, be2), attn


def init_params(key):
    ks = jax.random.split(key, 8)

    def lin(k, fan_in, fan_out):
        w = jax.random.normal(k, (fan_in, fan_out), jnp.float32) / math.sqrt(fan_in)
        b = jnp.zeros((1, fan_out), jnp.float32)
        return w, b

    wq, bq = lin(ks[0], D_MODEL, N_HEADS * D_K)
    wk, bk = lin(ks[1], D_MODEL, N_HEADS * D_K)
    wv, bv = lin(ks[2], D_MODEL, N_HEADS * D_V)
    wo, bo = lin(ks[3], N_HEADS * D_V, D_MODEL)
    w1, b1 = lin(ks[4], D_MODEL, D_FF)     # conv1 (kernel_size=1) as matmul
    w2, b2 = lin(ks[5], D_FF, D_MODEL)     # conv2 (kernel_size=1) as matmul
    g1 = jnp.ones((1, D_MODEL), jnp.float32); be1 = jnp.zeros((1, D_MODEL), jnp.float32)
    g2 = jnp.ones((1, D_MODEL), jnp.float32); be2 = jnp.zeros((1, D_MODEL), jnp.float32)
    return (wq, bq, wk, bk, wv, bv, wo, bo, g1, be1, w1, b1, w2, b2, g2, be2)


if __name__ == "__main__":
    key = jax.random.PRNGKey(0)
    kx, kp = jax.random.split(key)

    x = jax.random.normal(kx, (B, S, D_MODEL), jnp.float32)
    # Padding-style self-attention mask: last 2 key positions are masked out.
    key_pad = jnp.arange(S) >= (S - 2)                        # (S,)
    mask_bool = jnp.broadcast_to(key_pad[None, None, :], (B, S, S))
    params = init_params(kp)

    out, attn = encoder_layer(x, mask_bool, params)
    jax.block_until_ready(out)
    jax.block_until_ready(attn)

    out_r, attn_r = encoder_layer_ref(x, mask_bool, params)
    assert jnp.allclose(out, out_r, atol=1e-4, rtol=1e-4), "enc_outputs mismatch"
    assert jnp.allclose(attn, attn_r, atol=1e-5, rtol=1e-5), "attn mismatch"

    print("KERNEL_OK")
</pallas_src>

<mosaic_0001>
module attributes {stable_mosaic.version = 11 : i64} {
  func.func @encoder_layer_kernel(%arg0: i32, %arg1: memref<1x8x32xf32, #tpu.memory_space<vmem>>, %arg2: memref<1x8x8xf32, #tpu.memory_space<vmem>>, %arg3: memref<12x32x32xf32, #tpu.memory_space<vmem>>, %arg4: memref<12x1x32xf32, #tpu.memory_space<vmem>>, %arg5: memref<96x64xf32, #tpu.memory_space<vmem>>, %arg6: memref<7x64xf32, #tpu.memory_space<vmem>>, %arg7: memref<1x8x32xf32, #tpu.memory_space<vmem>>, %arg8: memref<1x4x8x8xf32, #tpu.memory_space<vmem>>) attributes {dimension_semantics = [#tpu.dimension_semantics<parallel>], iteration_bounds = array<i64: 2>, scalar_prefetch = 0 : i64, scratch_operands = 0 : i64, tpu.core_type = #tpu.core_type<tc>, window_params = [{transform_indices = @transform_0, window_bounds = array<i64: 1, 8, 32>}, {transform_indices = @transform_1, window_bounds = array<i64: 1, 8, 8>}, {pipeline_mode = #tpu.pipeline_mode<synchronous>, transform_indices = @transform_2, window_bounds = array<i64: 12, 32, 32>}, {pipeline_mode = #tpu.pipeline_mode<synchronous>, transform_indices = @transform_3, window_bounds = array<i64: 12, 1, 32>}, {pipeline_mode = #tpu.pipeline_mode<synchronous>, transform_indices = @transform_4, window_bounds = array<i64: 96, 64>}, {pipeline_mode = #tpu.pipeline_mode<synchronous>, transform_indices = @transform_5, window_bounds = array<i64: 7, 64>}, {transform_indices = @transform_6, window_bounds = array<i64: 1, 8, 32>}, {transform_indices = @transform_7, window_bounds = array<i64: 1, 4, 8, 8>}]} {
    %c0 = arith.constant 0 : index
    %c0_0 = arith.constant 0 : index
    %c0_1 = arith.constant 0 : index
    %0 = vector.load %arg1[%c0, %c0_0, %c0_1] : memref<1x8x32xf32, #tpu.memory_space<vmem>>, vector<1x8x32xf32>
    %1 = vector.shape_cast %0 : vector<1x8x32xf32> to vector<8x32xf32>
    %c0_2 = arith.constant 0 : index
    %c0_3 = arith.constant 0 : index
    %c0_4 = arith.constant 0 : index
    %2 = vector.load %arg2[%c0_2, %c0_3, %c0_4] : memref<1x8x8xf32, #tpu.memory_space<vmem>>, vector<1x8x8xf32>
    %3 = vector.shape_cast %2 : vector<1x8x8xf32> to vector<8x8xf32>
    %c0_5 = arith.constant 0 : index
    %c0_6 = arith.constant 0 : index
    %c0_7 = arith.constant 0 : index
    %4 = vector.load %arg3[%c0_5, %c0_6, %c0_7] : memref<12x32x32xf32, #tpu.memory_space<vmem>>, vector<12x32x32xf32>
    %c0_8 = arith.constant 0 : index
    %c0_9 = arith.constant 0 : index
    %c0_10 = arith.constant 0 : index
    %5 = vector.load %arg4[%c0_8, %c0_9, %c0_10] : memref<12x1x32xf32, #tpu.memory_space<vmem>>, vector<12x1x32xf32>
    %6 = vector.shape_cast %1 : vector<8x32xf32> to vector<1x8x32xf32>
    %7 = vector.shape_cast %6 : vector<1x8x32xf32> to vector<1x8x32xf32>
    %8 = vector.broadcast %7 : vector<1x8x32xf32> to vector<12x8x32xf32>
    "tpu.trace_start"() <{level = 10 : i32, message = "hsd,hdm->hsm"}> : () -> ()
    %cst = arith.constant dense<0.000000e+00> : vector<12x8x32xf32>
    %9 = tpu.matmul %8, %4, %cst {dimension_numbers = #tpu.dot_dimension_numbers<[2], [1], [1], [2], [0, 0, 0, 1, 1, 2], [0], [0]>} : vector<12x8x32xf32>, vector<12x32x32xf32>, vector<12x8x32xf32> -> vector<12x8x32xf32>
    "tpu.trace_stop"() : () -> ()
    %10 = vector.broadcast %5 : vector<12x1x32xf32> to vector<12x8x32xf32>
    %11 = arith.addf %9, %10 : vector<12x8x32xf32>
    %12 = vector.extract_strided_slice %11 {offsets = [0, 0, 0], sizes = [4, 8, 32], strides = [1, 1, 1]} : vector<12x8x32xf32> to vector<4x8x32xf32>
    %13 = vector.extract_strided_slice %11 {offsets = [4, 0, 0], sizes = [4, 8, 32], strides = [1, 1, 1]} : vector<12x8x32xf32> to vector<4x8x32xf32>
    %14 = vector.extract_strided_slice %11 {offsets = [8, 0, 0], sizes = [4, 8, 32], strides = [1, 1, 1]} : vector<12x8x32xf32> to vector<4x8x32xf32>
    "tpu.trace_start"() <{level = 10 : i32, message = "hqd,hkd->hqk"}> : () -> ()
    %cst_11 = arith.constant dense<0.000000e+00> : vector<4x8x8xf32>
    %15 = tpu.matmul %12, %13, %cst_11 {dimension_numbers = #tpu.dot_dimension_numbers<[2], [2], [1], [1], [0, 0, 0, 1, 1, 1], [0], [0]>} : vector<4x8x32xf32>, vector<4x8x32xf32>, vector<4x8x8xf32> -> vector<4x8x8xf32>
    "tpu.trace_stop"() : () -> ()
    %cst_12 = arith.constant 0.353553385 : f32
    %16 = vector.broadcast %cst_12 : f32 to vector<4x8x8xf32>
    %17 = arith.mulf %15, %16 : vector<4x8x8xf32>
    %18 = vector.shape_cast %3 : vector<8x8xf32> to vector<1x8x8xf32>
    %19 = vector.broadcast %18 : vector<1x8x8xf32> to vector<4x8x8xf32>
    %20 = arith.addf %17, %19 : vector<4x8x8xf32>
    %cst_13 = arith.constant dense<0xFF800000> : vector<4x8xf32>
    %21 = vector.multi_reduction <maximumf>, %20, %cst_13 [2] : vector<4x8x8xf32> to vector<4x8xf32>
    %22 = vector.shape_cast %21 : vector<4x8xf32> to vector<4x8x1xf32>
    %23 = vector.broadcast %22 : vector<4x8x1xf32> to vector<4x8x8xf32>
    %24 = arith.subf %20, %23 : vector<4x8x8xf32>
    %25 = math.exp %24 : vector<4x8x8xf32>
    %cst_14 = arith.constant dense<0.000000e+00> : vector<4x8xf32>
    %26 = vector.multi_reduction <add>, %25, %cst_14 [2] : vector<4x8x8xf32> to vector<4x8xf32>
    %27 = vector.shape_cast %26 : vector<4x8xf32> to vector<4x8x1xf32>
    %28 = vector.broadcast %27 : vector<4x8x1xf32> to vector<4x8x8xf32>
    %29 = arith.divf %25, %28 : vector<4x8x8xf32>
    %c0_15 = arith.constant 0 : index
    %c0_16 = arith.constant 0 : index
    %c0_17 = arith.constant 0 : index
    %c0_18 = arith.constant 0 : index
    %30 = vector.load %arg8[%c0_15, %c0_16, %c0_17, %c0_18] : memref<1x4x8x8xf32, #tpu.memory_space<vmem>>, vector<1x4x8x8xf32>
    %31 = vector.shape_cast %30 : vector<1x4x8x8xf32> to vector<4x8x8xf32>
    %32 = vector.shape_cast %29 : vector<4x8x8xf32> to vector<1x4x8x8xf32>
    tpu.vector_store %arg8[%c0_15, %c0_16, %c0_17, %c0_18], %32 {strides = array<i32>} : memref<1x4x8x8xf32, #tpu.memory_space<vmem>>, vector<1x4x8x8xf32>,
    %c0_19 = arith.constant 0 : index
    %c0_20 = arith.constant 0 : index
    %33 = vector.load %arg6[%c0_19, %c0_20] : memref<7x64xf32, #tpu.memory_space<vmem>>, vector<7x64xf32>
    %34 = vector.extract_strided_slice %33 {offsets = [0, 0], sizes = [1, 32], strides = [1, 1]} : vector<7x64xf32> to vector<1x32xf32>
    %35 = vector.extract_strided_slice %33 {offsets = [1, 0], sizes = [1, 32], strides = [1, 1]} : vector<7x64xf32> to vector<1x32xf32>
    %36 = vector.extract_strided_slice %33 {offsets = [2, 0], sizes = [1, 32], strides = [1, 1]} : vector<7x64xf32> to vector<1x32xf32>
    %37 = vector.extract_strided_slice %33 {offsets = [3, 0], sizes = [1, 64], strides = [1, 1]} : vector<7x64xf32> to vector<1x64xf32>
    %38 = vector.extract_strided_slice %33 {offsets = [4, 0], sizes = [1, 32], strides = [1, 1]} : vector<7x64xf32> to vector<1x32xf32>
    %39 = vector.extract_strided_slice %33 {offsets = [5, 0], sizes = [1, 32], strides = [1, 1]} : vector<7x64xf32> to vector<1x32xf32>
    %40 = vector.extract_strided_slice %33 {offsets = [6, 0], sizes = [1, 32], strides = [1, 1]} : vector<7x64xf32> to vector<1x32xf32>
    "tpu.trace_start"() <{level = 10 : i32, message = "hqk,hkm->hqm"}> : () -> ()
    %cst_21 = arith.constant dense<0.000000e+00> : vector<4x8x32xf32>
    %41 = tpu.matmul %29, %14, %cst_21 {dimension_numbers = #tpu.dot_dimension_numbers<[2], [1], [1], [2], [0, 0, 0, 1, 1, 2], [0], [0]>} : vector<4x8x8xf32>, vector<4x8x32xf32>, vector<4x8x32xf32> -> vector<4x8x32xf32>
    "tpu.trace_stop"() : () -> ()
    %cst_22 = arith.constant dense<0.000000e+00> : vector<8x32xf32>
    %42 = vector.multi_reduction <add>, %41, %cst_22 [0] : vector<4x8x32xf32> to vector<8x32xf32>
    %43 = vector.broadcast %34 : vector<1x32xf32> to vector<8x32xf32>
    %44 = arith.addf %42, %43 : vector<8x32xf32>
    %45 = arith.addf %44, %1 : vector<8x32xf32>
    %cst_23 = arith.constant dense<0.000000e+00> : vector<8xf32>
    %46 = vector.multi_reduction <add>, %45, %cst_23 [1] : vector<8x32xf32> to vector<8xf32>
    %47 = vector.shape_cast %46 : vector<8xf32> to vector<8x1xf32>
    %cst_24 = arith.constant 3.200000e+01 : f32
    %48 = vector.broadcast %cst_24 : f32 to vector<8x1xf32>
    %49 = arith.divf %47, %48 : vector<8x1xf32>
    %50 = vector.broadcast %49 : vector<8x1xf32> to vector<8x32xf32>
    %51 = arith.subf %45, %50 : vector<8x32xf32>
    %52 = arith.mulf %51, %51 : vector<8x32xf32>
    %cst_25 = arith.constant dense<0.000000e+00> : vector<8xf32>
    %53 = vector.multi_reduction <add>, %52, %cst_25 [1] : vector<8x32xf32> to vector<8xf32>
    %54 = vector.shape_cast %53 : vector<8xf32> to vector<8x1xf32>
    %cst_26 = arith.constant 3.200000e+01 : f32
    %55 = vector.broadcast %cst_26 : f32 to vector<8x1xf32>
    %56 = arith.divf %54, %55 : vector<8x1xf32>
    %57 = vector.broadcast %49 : vector<8x1xf32> to vector<8x32xf32>
    %58 = arith.subf %45, %57 : vector<8x32xf32>
    %cst_27 = arith.constant 9.99999974E-6 : f32
    %59 = vector.broadcast %cst_27 : f32 to vector<8x1xf32>
    %60 = arith.addf %56, %59 : vector<8x1xf32>
    %61 = math.rsqrt %60 : vector<8x1xf32>
    %62 = vector.broadcast %61 : vector<8x1xf32> to vector<8x32xf32>
    %63 = arith.mulf %58, %62 : vector<8x32xf32>
    %64 = vector.broadcast %35 : vector<1x32xf32> to vector<8x32xf32>
    %65 = arith.mulf %63, %64 : vector<8x32xf32>
    %66 = vector.broadcast %36 : vector<1x32xf32> to vector<8x32xf32>
    %67 = arith.addf %65, %66 : vector<8x32xf32>
    %c0_28 = arith.constant 0 : index
    %c0_29 = arith.constant 0 : index
    %68 = vector.load %arg5[%c0_28, %c0_29] : memref<96x64xf32, #tpu.memory_space<vmem>>, vector<32x64xf32>
    %c32 = arith.constant 32 : index
    %c0_30 = arith.constant 0 : index
    %69 = vector.load %arg5[%c32, %c0_30] : memref<96x64xf32, #tpu.memory_space<vmem>>, vector<64x32xf32>
    %cst_31 = arith.constant dense<0.000000e+00> : vector<8x64xf32>
    %70 = tpu.matmul %67, %68, %cst_31 {dimension_numbers = #tpu.dot_dimension_numbers<[1], [0], [0], [1], [0, 0, 1, 1], [], []>} : vector<8x32xf32>, vector<32x64xf32>, vector<8x64xf32> -> vector<8x64xf32>
    %71 = vector.broadcast %37 : vector<1x64xf32> to vector<8x64xf32>
    %72 = arith.addf %70, %71 : vector<8x64xf32>
    %cst_32 = arith.constant 0.000000e+00 : f32
    %73 = vector.broadcast %cst_32 : f32 to vector<8x64xf32>
    %74 = arith.maximumf %72, %73 : vector<8x64xf32>
    %cst_33 = arith.constant dense<0.000000e+00> : vector<8x32xf32>
    %75 = tpu.matmul %74, %69, %cst_33 {dimension_numbers = #tpu.dot_dimension_numbers<[1], [0], [0], [1], [0, 0, 1, 1], [], []>} : vector<8x64xf32>, vector<64x32xf32>, vector<8x32xf32> -> vector<8x32xf32>
    %76 = vector.broadcast %38 : vector<1x32xf32> to vector<8x32xf32>
    %77 = arith.addf %75, %76 : vector<8x32xf32>
    %78 = arith.addf %77, %67 : vector<8x32xf32>
    %cst_34 = arith.constant dense<0.000000e+00> : vector<8xf32>
    %79 = vector.multi_reduction <add>, %78, %cst_34 [1] : vector<8x32xf32> to vector<8xf32>
    %80 = vector.shape_cast %79 : vector<8xf32> to vector<8x1xf32>
    %cst_35 = arith.constant 3.200000e+01 : f32
    %81 = vector.broadcast %cst_35 : f32 to vector<8x1xf32>
    %82 = arith.divf %80, %81 : vector<8x1xf32>
    %83 = vector.broadcast %82 : vector<8x1xf32> to vector<8x32xf32>
    %84 = arith.subf %78, %83 : vector<8x32xf32>
    %85 = arith.mulf %84, %84 : vector<8x32xf32>
    %cst_36 = arith.constant dense<0.000000e+00> : vector<8xf32>
    %86 = vector.multi_reduction <add>, %85, %cst_36 [1] : vector<8x32xf32> to vector<8xf32>
    %87 = vector.shape_cast %86 : vector<8xf32> to vector<8x1xf32>
    %cst_37 = arith.constant 3.200000e+01 : f32
    %88 = vector.broadcast %cst_37 : f32 to vector<8x1xf32>
    %89 = arith.divf %87, %88 : vector<8x1xf32>
    %90 = vector.broadcast %82 : vector<8x1xf32> to vector<8x32xf32>
    %91 = arith.subf %78, %90 : vector<8x32xf32>
    %cst_38 = arith.constant 9.99999974E-6 : f32
    %92 = vector.broadcast %cst_38 : f32 to vector<8x1xf32>
    %93 = arith.addf %89, %92 : vector<8x1xf32>
    %94 = math.rsqrt %93 : vector<8x1xf32>
    %95 = vector.broadcast %94 : vector<8x1xf32> to vector<8x32xf32>
    %96 = arith.mulf %91, %95 : vector<8x32xf32>
    %97 = vector.broadcast %39 : vector<1x32xf32> to vector<8x32xf32>
    %98 = arith.mulf %96, %97 : vector<8x32xf32>
    %99 = vector.broadcast %40 : vector<1x32xf32> to vector<8x32xf32>
    %100 = arith.addf %98, %99 : vector<8x32xf32>
    %c0_39 = arith.constant 0 : index
    %c0_40 = arith.constant 0 : index
    %c0_41 = arith.constant 0 : index
    %101 = vector.load %arg7[%c0_39, %c0_40, %c0_41] : memref<1x8x32xf32, #tpu.memory_space<vmem>>, vector<1x8x32xf32>
    %102 = vector.shape_cast %101 : vector<1x8x32xf32> to vector<8x32xf32>
    %103 = vector.shape_cast %100 : vector<8x32xf32> to vector<1x8x32xf32>
    tpu.vector_store %arg7[%c0_39, %c0_40, %c0_41], %103 {strides = array<i32>} : memref<1x8x32xf32, #tpu.memory_space<vmem>>, vector<1x8x32xf32>,
    return
  }
  func.func @transform_0(%arg0: i32) -> (i32, i32, i32) {
    %c0_i32 = arith.constant 0 : i32
    %c0_i32_0 = arith.constant 0 : i32
    %c0_i32_1 = arith.constant 0 : i32
    return %arg0, %c0_i32, %c0_i32_0 : i32, i32, i32
  }
  func.func @transform_1(%arg0: i32) -> (i32, i32, i32) {
    %c0_i32 = arith.constant 0 : i32
    %c0_i32_0 = arith.constant 0 : i32
    %c0_i32_1 = arith.constant 0 : i32
    return %arg0, %c0_i32, %c0_i32_0 : i32, i32, i32
  }
  func.func @transform_2(%arg0: i32) -> (i32, i32, i32) {
    %c0_i32 = arith.constant 0 : i32
    %c0_i32_0 = arith.constant 0 : i32
    %c0_i32_1 = arith.constant 0 : i32
    %c0_i32_2 = arith.constant 0 : i32
    return %c0_i32, %c0_i32_0, %c0_i32_1 : i32, i32, i32
  }
  func.func @transform_3(%arg0: i32) -> (i32, i32, i32) {
    %c0_i32 = arith.constant 0 : i32
    %c0_i32_0 = arith.constant 0 : i32
    %c0_i32_1 = arith.constant 0 : i32
    %c0_i32_2 = arith.constant 0 : i32
    return %c0_i32, %c0_i32_0, %c0_i32_1 : i32, i32, i32
  }
  func.func @transform_4(%arg0: i32) -> (i32, i32) {
    %c0_i32 = arith.constant 0 : i32
    %c0_i32_0 = arith.constant 0 : i32
    %c0_i32_1 = arith.constant 0 : i32
    return %c0_i32, %c0_i32_0 : i32, i32
  }
  func.func @transform_5(%arg0: i32) -> (i32, i32) {
    %c0_i32 = arith.constant 0 : i32
    %c0_i32_0 = arith.constant 0 : i32
    %c0_i32_1 = arith.constant 0 : i32
    return %c0_i32, %c0_i32_0 : i32, i32
  }
  func.func @transform_6(%arg0: i32) -> (i32, i32, i32) {
    %c0_i32 = arith.constant 0 : i32
    %c0_i32_0 = arith.constant 0 : i32
    %c0_i32_1 = arith.constant 0 : i32
    return %arg0, %c0_i32, %c0_i32_0 : i32, i32, i32
  }
  func.func @transform_7(%arg0: i32) -> (i32, i32, i32, i32) {
    %c0_i32 = arith.constant 0 : i32
    %c0_i32_0 = arith.constant 0 : i32
    %c0_i32_1 = arith.constant 0 : i32
    %c0_i32_2 = arith.constant 0 : i32
    return %arg0, %c0_i32, %c0_i32_0, %c0_i32_1 : i32, i32, i32, i32
  }
}

</mosaic_0001>

<llo_original>
// kernel: encoder_layer.1
$region0: #{encoder_layer.1}
  #allocation0 [shape = 'u32[]', space=smem, size = 0x4, offset = 0x4, fixed_abs, tag = 'smem constant byte address 0x4 - core index']
  #allocation1 [shape = 'u32[144,128]{1,0:T(1,128)}', space=vmem, size = 0x12000, scoped, tag = 'internal scratch']
  %s0 = inlined_call_operand.vmem [shape: f32[2,8,32], index: 0, kind: input, shape index: {}]
  %s1 = inlined_call_operand.vmem [shape: f32[2,8,8], index: 1, kind: input, shape index: {}]
  %s2 = inlined_call_operand.vmem [shape: f32[12,32,32], index: 2, kind: input, shape index: {}]
  %s3 = inlined_call_operand.vmem [shape: f32[12,1,32], index: 3, kind: input, shape index: {}]
  %s4 = inlined_call_operand.vmem [shape: f32[96,64], index: 4, kind: input, shape index: {}]
  %s5 = inlined_call_operand.vmem [shape: f32[7,64], index: 5, kind: input, shape index: {}]
  %s6 = inlined_call_operand.hbm [shape: f32[2,8,32], index: 6, kind: output, shape index: {0}]
  %s7 = inlined_call_operand.hbm [shape: f32[2,4,8,8], index: 7, kind: output, shape index: {1}]
  %8 = xla_tuple %s6, %s7
  %s9 = sld [smem:[#allocation0]]
  $region65: #{encoder_layer.1} parent=0
    _
  %s11 = ssub.s32 1, %s9
  %s12 = scalar_select 0, %s11, %s9
  $region1: #{encoder_layer.1} parent=0
    #allocation2 [shape = 'u8[8192]{0}', space=vmem, size = 0x2000, scoped, tag = 'output window, operand 0']
    #allocation3 [shape = 's32[2]{0}', space=sflag, size = 0x8, scoped, tag = 'scoped memory for encoder_layer.1']
    #allocation4 [shape = 'u8[32768]{0}', space=vmem, size = 0x8000, scoped, tag = 'output window, operand 1']
    #allocation5 [shape = 's32[2]{0}', space=sflag, size = 0x8, scoped, tag = 'scoped memory for encoder_layer.1']
    %13 = vsyncpa [#allocation3], 0
    %s14 = scalar_lea.sflag [#allocation3], 1
    %15 = vsyncpa %s14, 0
    %16 = vsyncpa [#allocation5], 0
    %s17 = scalar_lea.sflag [#allocation5], 1
    %18 = vsyncpa %s17, 0
    loop: start=0, step=1, limit=4
    $region2: #{encoder_layer.1} parent=1 // loop_pre_header
      _
    $region3: #{encoder_layer.1} parent=1 // loop_header
      %s20 = sphi 0, %s24
      %p21 = scmp.ge.s32.totalorder %s20, 4
      %s30 = sphi 0, %s32
      %s33 = sphi 0, %s30
      %s34 = sphi 0, %s33
      %s50 = sphi 0, %s34
      %s56 = sphi 0, %s58
      %s59 = sphi 0, %s56
      %s60 = sphi 0, %s59
      %s76 = sphi 0, %s60
      %s80 = sphi 0, %s80
      %s82 = sphi 0, %s80
      %s83 = sphi 0, %s82
      %s97 = sphi 0, %s83
      %s101 = sphi 0, %s101
      %s103 = sphi 0, %s101
      %s104 = sphi 0, %s103
      %s118 = sphi 0, %s104
      %s122 = sphi 0, %s122
      %s124 = sphi 0, %s122
      %s125 = sphi 0, %s124
      %s139 = sphi 0, %s125
      %s143 = sphi 0, %s143
      %s145 = sphi 0, %s143
      %s146 = sphi 0, %s145
      %s160 = sphi 0, %s146
      %s166 = sphi 0, %s168
      %s169 = sphi 0, %s166
      %s170 = sphi 0, %s169
      %s186 = sphi 0, %s170
      %s192 = sphi 0, %s194
      %s195 = sphi 0, %s192
      %s196 = sphi 0, %s195
      %s212 = sphi 0, %s196
    $region4: #{encoder_layer.1} parent=1 // loop_header_branch
      %23 = sbr.rel (%p21) target = $region8
    $region5: #{encoder_layer.1} parent=1 // loop_body
      %s25 = ssub.s32 %s20, 1
      %s26 = ssub.s32 %s20, 2
      %s27 = sadd.s32 %s20, 1
      %s28 = ssub.s32 %s20, %s27
      %p29 = scmp.eq.s32.totalorder %s28, 0
      %s31 = sadd.s32 %s30, 1
      %s32 = scalar_select %p29, %s30, %s31
      %p35 = pneg %p29
      %p36 = scmp.eq.s32.totalorder %s20, 1
      %p37 = por %p35, %p36
      %p38 = scmp.ne.s32.totalorder %s30, %s33
      %p39 = scmp.eq.s32.totalorder %s20, 0
      %p40 = por %p38, %p39
      %p41 = scmp.ne.s32.totalorder %s30, %s33
      %p42 = scmp.eq.s32.totalorder %s25, 1
      %p43 = por %p41, %p42
      %p44 = scmp.ne.s32.totalorder %s33, %s34
      %p45 = scmp.eq.s32.totalorder %s25, 0
      %p46 = por %p44, %p45
      %p47 = scmp.ne.s32.totalorder %s33, %s34
      %p48 = scmp.eq.s32.totalorder %s26, 1
      %p49 = por %p47, %p48
      %p51 = scmp.ne.s32.totalorder %s34, %s50
      %p52 = scmp.eq.s32.totalorder %s26, 0
      %p53 = por %p51, %p52
      %s54 = ssub.s32 %s20, %s27
      %p55 = scmp.eq.s32.totalorder %s54, 0
      %s57 = sadd.s32 %s56, 1
      %s58 = scalar_select %p55, %s56, %s57
      %p61 = pneg %p55
      %p62 = scmp.eq.s32.totalorder %s20, 1
      %p63 = por %p61, %p62
      %p64 = scmp.ne.s32.totalorder %s56, %s59
      %p65 = scmp.eq.s32.totalorder %s20, 0
      %p66 = por %p64, %p65
      %p67 = scmp.ne.s32.totalorder %s56, %s59
      %p68 = scmp.eq.s32.totalorder %s25, 1
      %p69 = por %p67, %p68
      %p70 = scmp.ne.s32.totalorder %s59, %s60
      %p71 = scmp.eq.s32.totalorder %s25, 0
      %p72 = por %p70, %p71
      %p73 = scmp.ne.s32.totalorder %s59, %s60
      %p74 = scmp.eq.s32.totalorder %s26, 1
      %p75 = por %p73, %p74
      %p77 = scmp.ne.s32.totalorder %s60, %s76
      %p78 = scmp.eq.s32.totalorder %s26, 0
      %p79 = por %p77, %p78
      %s81 = sadd.s32 %s80, 1
      %p84 = scmp.eq.s32.totalorder %s20, 1
      %p85 = scmp.ne.s32.totalorder %s80, %s82
      %p86 = scmp.eq.s32.totalorder %s20, 0
      %p87 = por %p85, %p86
      %p88 = scmp.ne.s32.totalorder %s80, %s82
      %p89 = scmp.eq.s32.totalorder %s25, 1
      %p90 = por %p88, %p89
      %p91 = scmp.ne.s32.totalorder %s82, %s83
      %p92 = scmp.eq.s32.totalorder %s25, 0
      %p93 = por %p91, %p92
      %p94 = scmp.ne.s32.totalorder %s82, %s83
      %p95 = scmp.eq.s32.totalorder %s26, 1
      %p96 = por %p94, %p95
      %p98 = scmp.ne.s32.totalorder %s83, %s97
      %p99 = scmp.eq.s32.totalorder %s26, 0
      %p100 = por %p98, %p99
      %s102 = sadd.s32 %s101, 1
      %p105 = scmp.eq.s32.totalorder %s20, 1
      %p106 = scmp.ne.s32.totalorder %s101, %s103
      %p107 = scmp.eq.s32.totalorder %s20, 0
      %p108 = por %p106, %p107
      %p109 = scmp.ne.s32.totalorder %s101, %s103
      %p110 = scmp.eq.s32.totalorder %s25, 1
      %p111 = por %p109, %p110
      %p112 = scmp.ne.s32.totalorder %s103, %s104
      %p113 = scmp.eq.s32.totalorder %s25, 0
      %p114 = por %p112, %p113
      %p115 = scmp.ne.s32.totalorder %s103, %s104
      %p116 = scmp.eq.s32.totalorder %s26, 1
      %p117 = por %p115, %p116
      %p119 = scmp.ne.s32.totalorder %s104, %s118
      %p120 = scmp.eq.s32.totalorder %s26, 0
      %p121 = por %p119, %p120
      %s123 = sadd.s32 %s122, 1
      %p126 = scmp.eq.s32.totalorder %s20, 1
      %p127 = scmp.ne.s32.totalorder %s122, %s124
      %p128 = scmp.eq.s32.totalorder %s20, 0
      %p129 = por %p127, %p128
      %p130 = scmp.ne.s32.totalorder %s122, %s124
      %p131 = scmp.eq.s32.totalorder %s25, 1
      %p132 = por %p130, %p131
      %p133 = scmp.ne.s32.totalorder %s124, %s125
      %p134 = scmp.eq.s32.totalorder %s25, 0
      %p135 = por %p133, %p134
      %p136 = scmp.ne.s32.totalorder %s124, %s125
      %p137 = scmp.eq.s32.totalorder %s26, 1
      %p138 = por %p136, %p137
      %p140 = scmp.ne.s32.totalorder %s125, %s139
      %p141 = scmp.eq.s32.totalorder %s26, 0
      %p142 = por %p140, %p141
      %s144 = sadd.s32 %s143, 1
      %p147 = scmp.eq.s32.totalorder %s20, 1
      %p148 = scmp.ne.s32.totalorder %s143, %s145
      %p149 = scmp.eq.s32.totalorder %s20, 0
      %p150 = por %p148, %p149
      %p151 = scmp.ne.s32.totalorder %s143, %s145
      %p152 = scmp.eq.s32.totalorder %s25, 1
      %p153 = por %p151, %p152
      %p154 = scmp.ne.s32.totalorder %s145, %s146
      %p155 = scmp.eq.s32.totalorder %s25, 0
      %p156 = por %p154, %p155
      %p157 = scmp.ne.s32.totalorder %s145, %s146
      %p158 = scmp.eq.s32.totalorder %s26, 1
      %p159 = por %p157, %p158
      %p161 = scmp.ne.s32.totalorder %s146, %s160
      %p162 = scmp.eq.s32.totalorder %s26, 0
      %p163 = por %p161, %p162
      %s164 = ssub.s32 %s20, %s27
      %p165 = scmp.eq.s32.totalorder %s164, 0
      %s167 = sadd.s32 %s166, 1
      %s168 = scalar_select %p165, %s166, %s167
      %p171 = pneg %p165
      %p172 = scmp.eq.s32.totalorder %s20, 1
      %p173 = por %p171, %p172
      %p174 = scmp.ne.s32.totalorder %s166, %s169
      %p175 = scmp.eq.s32.totalorder %s20, 0
      %p176 = por %p174, %p175
      %p177 = scmp.ne.s32.totalorder %s166, %s169
      %p178 = scmp.eq.s32.totalorder %s25, 1
      %p179 = por %p177, %p178
      %p180 = scmp.ne.s32.totalorder %s169, %s170
      %p181 = scmp.eq.s32.totalorder %s25, 0
      %p182 = por %p180, %p181
      %p183 = scmp.ne.s32.totalorder %s169, %s170
      %p184 = scmp.eq.s32.totalorder %s26, 1
      %p185 = por %p183, %p184
      %p187 = scmp.ne.s32.totalorder %s170, %s186
      %p188 = scmp.eq.s32.totalorder %s26, 0
      %p189 = por %p187, %p188
      %s190 = ssub.s32 %s20, %s27
      %p191 = scmp.eq.s32.totalorder %s190, 0
      %s193 = sadd.s32 %s192, 1
      %s194 = scalar_select %p191, %s192, %s193
      %p197 = pneg %p191
      %p198 = scmp.eq.s32.totalorder %s20, 1
      %p199 = por %p197, %p198
      %p200 = scmp.ne.s32.totalorder %s192, %s195
      %p201 = scmp.eq.s32.totalorder %s20, 0
      %p202 = por %p200, %p201
      %p203 = scmp.ne.s32.totalorder %s192, %s195
      %p204 = scmp.eq.s32.totalorder %s25, 1
      %p205 = por %p203, %p204
      %p206 = scmp.ne.s32.totalorder %s195, %s196
      %p207 = scmp.eq.s32.totalorder %s25, 0
      %p208 = por %p206, %p207
      %p209 = scmp.ne.s32.totalorder %s195, %s196
      %p210 = scmp.eq.s32.totalorder %s26, 1
      %p211 = por %p209, %p210
      %p213 = scmp.ne.s32.totalorder %s196, %s212
      %p214 = scmp.eq.s32.totalorder %s26, 0
      %p215 = por %p213, %p214
      %p216 = scmp.le.s32.totalorder 1, %s20
      %p217 = scmp.lt.s32.totalorder %s20, 3
      %p218 = pnand %p216, %p217
      %p219 = pneg %p218
      // Predicated region
      $region9: #{encoder_layer.1} parent=5 // pred_check
        _
      $region10: #{encoder_layer.1} parent=5 // pred_check_branch
        %221 = sbr.rel (%p218) target = $region12
      $region11: #{encoder_layer.1} parent=5 // pred_region
        %s222 = ssub.s32 %s20, 1
        // Predicated region
        $region13: #{encoder_layer.1} parent=11 // pred_check
          %p223 = pneg %p93
        $region14: #{encoder_layer.1} parent=11 // pred_check_branch
          %225 = sbr.rel (%p223) target = $region16
        $region15: #{encoder_layer.1} parent=11 // pred_region
          _
        $region16: #{encoder_layer.1} parent=11 // pred_fallthru
          _
        // Predicated region
        $region17: #{encoder_layer.1} parent=11 // pred_check
          %p226 = pneg %p114
        $region18: #{encoder_layer.1} parent=11 // pred_check_branch
          %228 = sbr.rel (%p226) target = $region20
        $region19: #{encoder_layer.1} parent=11 // pred_region
          _
        $region20: #{encoder_layer.1} parent=11 // pred_fallthru
          _
        // Predicated region
        $region21: #{encoder_layer.1} parent=11 // pred_check
          %p229 = pneg %p135
        $region22: #{encoder_layer.1} parent=11 // pred_check_branch
          %231 = sbr.rel (%p229) target = $region24
        $region23: #{encoder_layer.1} parent=11 // pred_region
          _
        $region24: #{encoder_layer.1} parent=11 // pred_fallthru
          _
        // Predicated region
        $region25: #{encoder_layer.1} parent=11 // pred_check
          %p232 = pneg %p156
        $region26: #{encoder_layer.1} parent=11 // pred_check_branch
          %234 = sbr.rel (%p232) target = $region28
        $region27: #{encoder_layer.1} parent=11 // pred_region
          _
        $region28: #{encoder_layer.1} parent=11 // pred_fallthru
          _
      $region12: #{encoder_layer.1} parent=5 // pred_fallthru
        _
      %p235 = scmp.lt.s32.totalorder %s20, 2
      // Predicated region
      $region29: #{encoder_layer.1} parent=5 // pred_check
        %p236 = pneg %p235
      $region30: #{encoder_layer.1} parent=5 // pred_check_branch
        %238 = sbr.rel (%p236) target = $region32
      $region31: #{encoder_layer.1} parent=5 // pred_region
        // Predicated region
        $region33: #{encoder_layer.1} parent=31 // pred_check
          %p239 = pneg %p40
        $region34: #{encoder_layer.1} parent=31 // pred_check_branch
          %241 = sbr.rel (%p239) target = $region36
        $region35: #{encoder_layer.1} parent=31 // pred_region
          %p242 = scmp.lt.s32.totalorder %s20, 1
          %s243 = scalar_select %p242, %s20, 1
          %s244 = smul.addr %s243, 8
          %s245 = scalar_lea.vmem %s0, %s244
        $region36: #{encoder_layer.1} parent=31 // pred_fallthru
          _
        // Predicated region
        $region37: #{encoder_layer.1} parent=31 // pred_check
          %p246 = pneg %p66
        $region38: #{encoder_layer.1} parent=31 // pred_check_branch
          %248 = sbr.rel (%p246) target = $region40
        $region39: #{encoder_layer.1} parent=31 // pred_region
          %p249 = scmp.lt.s32.totalorder %s20, 1
          %s250 = scalar_select %p249, %s20, 1
          %s251 = smul.addr %s250, 8
          %s252 = scalar_lea.vmem %s1, %s251
        $region40: #{encoder_layer.1} parent=31 // pred_fallthru
          _
      $region32: #{encoder_layer.1} parent=5 // pred_fallthru
        _
      %p253 = scmp.le.s32.totalorder 1, %s20
      %p254 = scmp.lt.s32.totalorder %s20, 3
      %p255 = pnand %p253, %p254
      %p256 = pneg %p255
      // Predicated region
      $region41: #{encoder_layer.1} parent=5 // pred_check
        _
      $region42: #{encoder_layer.1} parent=5 // pred_check_branch
        %258 = sbr.rel (%p255) target = $region44
      $region43: #{encoder_layer.1} parent=5 // pred_region
        %s259 = ssub.s32 %s20, 1
        %p260 = scmp.lt.s32.totalorder %s25, 1
        %s261 = scalar_select %p260, %s25, 1
        %s262 = smul.addr %s261, 8
        %s263 = scalar_lea.vmem %s0, %s262
        %p264 = pneg %p46
        %p265 = pneg %p43
        %p266 = scmp.lt.s32.totalorder %s25, 1
        %s267 = scalar_select %p266, %s25, 1
        %s268 = smul.addr %s267, 8
        %s269 = scalar_lea.vmem %s1, %s268
        %p270 = pneg %p72
        %p271 = pneg %p69
        %p272 = pneg %p93
        %p273 = pneg %p90
        %p274 = pneg %p114
        %p275 = pneg %p111
        %p276 = pneg %p135
        %p277 = pneg %p132
        %p278 = pneg %p156
        %p279 = pneg %p153
        %p280 = pneg %p182
        %p281 = pneg %p179
        %s282 = sand.u32 %s169, 1
        %s283 = scalar_lea.sflag [#allocation3], %s282
        %s284 = sand.u32 %s169, 1
        %s285 = smul.addr %s284, 8
        %s286 = scalar_lea.vmem [#allocation2], %s285
        %p287 = pneg %p208
        %p288 = pneg %p205
        %s289 = sand.u32 %s195, 1
        %s290 = scalar_lea.sflag [#allocation5], %s289
        %s291 = sand.u32 %s195, 1
        %s292 = smul.addr %s291, 32
        %s293 = scalar_lea.vmem [#allocation4], %s292
        %p294 = scmp.lt.s32.totalorder %s25, 1
        %s295 = scalar_select %p294, %s25, 1
        %s296 = smul.addr %s295, 8
        %s297 = scalar_lea.vmem %s0, %s296
        %p298 = scmp.lt.s32.totalorder %s25, 1
        %s299 = scalar_select %p298, %s25, 1
        %s300 = smul.addr %s299, 8
        %s301 = scalar_lea.vmem %s1, %s300
        %v302 = vld [vmem:[%s297] sm:$0xff]
        %v303 = vld [vmem:[%s301] sm:$0xff]
        %v304 = vld [vmem:[%s2] sm:$0xff]
        %v305 = vld [vmem:[%s2 + $0x8] sm:$0xff]
        %v306 = vld [vmem:[%s2 + $0x10] sm:$0xff]
        %v307 = vld [vmem:[%s2 + $0x18] sm:$0xff]
        %v308 = vld [vmem:[%s2 + $0x20] sm:$0xff]
        %v309 = vld [vmem:[%s2 + $0x28] sm:$0xff]
        %v310 = vld [vmem:[%s2 + $0x30] sm:$0xff]
        %v311 = vld [vmem:[%s2 + $0x38] sm:$0xff]
        %v312 = vld [vmem:[%s2 + $0x40] sm:$0xff]
        %v313 = vld [vmem:[%s2 + $0x48] sm:$0xff]
        %v314 = vld [vmem:[%s2 + $0x50] sm:$0xff]
        %v315 = vld [vmem:[%s2 + $0x58] sm:$0xff]
        %v316 = vld [vmem:[%s2 + $0x60] sm:$0xff]
        %v317 = vld [vmem:[%s2 + $0x68] sm:$0xff]
        %v318 = vld [vmem:[%s2 + $0x70] sm:$0xff]
        %v319 = vld [vmem:[%s2 + $0x78] sm:$0xff]
        %v320 = vld [vmem:[%s2 + $0x80] sm:$0xff]
        %v321 = vld [vmem:[%s2 + $0x88] sm:$0xff]
        %v322 = vld [vmem:[%s2 + $0x90] sm:$0xff]
        %v323 = vld [vmem:[%s2 + $0x98] sm:$0xff]
        %v324 = vld [vmem:[%s2 + $0xa0] sm:$0xff]
        %v325 = vld [vmem:[%s2 + $0xa8] sm:$0xff]
        %v326 = vld [vmem:[%s2 + $0xb0] sm:$0xff]
        %v327 = vld [vmem:[%s2 + $0xb8] sm:$0xff]
        %v328 = vld [vmem:[%s2 + $0xc0] sm:$0xff]
        %v329 = vld [vmem:[%s2 + $0xc8] sm:$0xff]
        %v330 = vld [vmem:[%s2 + $0xd0] sm:$0xff]
        %v331 = vld [vmem:[%s2 + $0xd8] sm:$0xff]
        %v332 = vld [vmem:[%s2 + $0xe0] sm:$0xff]
        %v333 = vld [vmem:[%s2 + $0xe8] sm:$0xff]
        %v334 = vld [vmem:[%s2 + $0xf0] sm:$0xff]
        %v335 = vld [vmem:[%s2 + $0xf8] sm:$0xff]
        %v336 = vld [vmem:[%s2 + $0x100] sm:$0xff]
        %v337 = vld [vmem:[%s2 + $0x108] sm:$0xff]
        %v338 = vld [vmem:[%s2 + $0x110] sm:$0xff]
        %v339 = vld [vmem:[%s2 + $0x118] sm:$0xff]
        %v340 = vld [vmem:[%s2 + $0x120] sm:$0xff]
        %v341 = vld [vmem:[%s2 + $0x128] sm:$0xff]
        %v342 = vld [vmem:[%s2 + $0x130] sm:$0xff]
        %v343 = vld [vmem:[%s2 + $0x138] sm:$0xff]
        %v344 = vld [vmem:[%s2 + $0x140] sm:$0xff]
        %v345 = vld [vmem:[%s2 + $0x148] sm:$0xff]
        %v346 = vld [vmem:[%s2 + $0x150] sm:$0xff]
        %v347 = vld [vmem:[%s2 + $0x158] sm:$0xff]
        %v348 = vld [vmem:[%s2 + $0x160] sm:$0xff]
        %v349 = vld [vmem:[%s2 + $0x168] sm:$0xff]
        %v350 = vld [vmem:[%s2 + $0x170] sm:$0xff]
        %v351 = vld [vmem:[%s2 + $0x178] sm:$0xff]
        %v352 = vld [vmem:[%s3] sm:$0x1]
        %v353 = vld [vmem:[%s3 + $0x1] sm:$0x1]
        %v354 = vld [vmem:[%s3 + $0x2] sm:$0x1]
        %v355 = vld [vmem:[%s3 + $0x3] sm:$0x1]
        %v356 = vld [vmem:[%s3 + $0x4] sm:$0x1]
        %v357 = vld [vmem:[%s3 + $0x5] sm:$0x1]
        %v358 = vld [vmem:[%s3 + $0x6] sm:$0x1]
        %v359 = vld [vmem:[%s3 + $0x7] sm:$0x1]
        %v360 = vld [vmem:[%s3 + $0x8] sm:$0x1]
        %v361 = vld [vmem:[%s3 + $0x9] sm:$0x1]
        %v362 = vld [vmem:[%s3 + $0xa] sm:$0x1]
        %v363 = vld [vmem:[%s3 + $0xb] sm:$0x1]
        %v376 = vlaneseq
        %v377 = vshrl.u32 %v376, 7
        %v378 = vsub.s32 0, %v377
        %v379 = vrot.slane %v352, %v378
        %v380 = vlaneseq
        %v381 = vshrl.u32 %v380, 7
        %v382 = vsub.s32 0, %v381
        %v383 = vrot.slane %v353, %v382
        %v384 = vlaneseq
        %v385 = vshrl.u32 %v384, 7
        %v386 = vsub.s32 0, %v385
        %v387 = vrot.slane %v354, %v386
        %v388 = vlaneseq
        %v389 = vshrl.u32 %v388, 7
        %v390 = vsub.s32 0, %v389
        %v391 = vrot.slane %v355, %v390
        %v392 = vlaneseq
        %v393 = vshrl.u32 %v392, 7
        %v394 = vsub.s32 0, %v393
        %v395 = vrot.slane %v356, %v394
        %v396 = vlaneseq
        %v397 = vshrl.u32 %v396, 7
        %v398 = vsub.s32 0, %v397
        %v399 = vrot.slane %v357, %v398
        %v400 = vlaneseq
        %v401 = vshrl.u32 %v400, 7
        %v402 = vsub.s32 0, %v401
        %v403 = vrot.slane %v358, %v402
        %v404 = vlaneseq
        %v405 = vshrl.u32 %v404, 7
        %v406 = vsub.s32 0, %v405
        %v407 = vrot.slane %v359, %v406
        %v408 = vlaneseq
        %v409 = vshrl.u32 %v408, 7
        %v410 = vsub.s32 0, %v409
        %v411 = vrot.slane %v360, %v410
        %v412 = vlaneseq
        %v413 = vshrl.u32 %v412, 7
        %v414 = vsub.s32 0, %v413
        %v415 = vrot.slane %v361, %v414
        %v416 = vlaneseq
        %v417 = vshrl.u32 %v416, 7
        %v418 = vsub.s32 0, %v417
        %v419 = vrot.slane %v362, %v418
        %v420 = vlaneseq
        %v421 = vshrl.u32 %v420, 7
        %v422 = vsub.s32 0, %v421
        %v423 = vrot.slane %v363, %v422
        %vm436 = vcmask 261120
        %v438 = vsel %vm436, %v302, 0
        %440 = vmatprep.subr.mxu0 0.0
        %441 = vmatpush1.msra.mxu0 %v304
        %442 = vmatprep.subr.mxu0 0.0
        %443 = vmatpush1.msra.mxu0 %v305
        %444 = vmatprep.subr.mxu0 0.0
        %445 = vmatpush1.msra.mxu0 %v306
        %446 = vmatprep.subr.mxu0 0.0
        %447 = vmatpush1.msra.mxu0 %v307
        %448 = vmatprep.subr.mxu0 0.0
        %449 = vmatpush1.msra.mxu0 0.0
        %450 = vmatprep.subr.mxu0 0.0
        %451 = vmatpush1.msra.mxu0 0.0
        %452 = vmatprep.subr.mxu0 0.0
        %453 = vmatpush1.msra.mxu0 0.0
        %454 = vmatprep.subr.mxu0 0.0
        %455 = vmatpush1.msra.mxu0 0.0
        %456 = vmatprep.subr.mxu0 0.0
        %457 = vmatpush1.msra.mxu0 0.0
        %458 = vmatprep.subr.mxu0 0.0
        %459 = vmatpush1.msra.mxu0 0.0
        %460 = vmatprep.subr.mxu0 0.0
        %461 = vmatpush1.msra.mxu0 0.0
        %462 = vmatprep.subr.mxu0 0.0
        %463 = vmatpush1.msra.mxu0 0.0
        %464 = vmatprep.subr.mxu0 0.0
        %465 = vmatpush1.msra.mxu0 0.0
        %466 = vmatprep.subr.mxu0 0.0
        %467 = vmatpush1.msra.mxu0 0.0
        %468 = vmatprep.subr.mxu0 0.0
        %469 = vmatpush1.msra.mxu0 0.0
        %470 = vmatprep.subr.mxu0 0.0
        %471 = vmatpush1.msra.mxu0 0.0
        %472 = vmatprep.subr.mxu0 0.0
        %473 = vmatpush1.msra.mxu0 0.0
        %474 = vmatprep.subr.mxu0 0.0
        %475 = vmatpush1.msra.mxu0 0.0
        %476 = vmatprep.subr.mxu0 0.0
        %477 = vmatpush1.msra.mxu0 0.0
        %478 = vmatprep.subr.mxu0 0.0
        %479 = vmatpush1.msra.mxu0 0.0
        %480 = vmatprep.subr.mxu0 0.0
        %481 = vmatpush1.msra.mxu0 0.0
        %482 = vmatprep.subr.mxu0 0.0
        %483 = vmatpush1.msra.mxu0 0.0
        %484 = vmatprep.subr.mxu0 0.0
        %485 = vmatpush1.msra.mxu0 0.0
        %486 = vmatprep.subr.mxu0 0.0
        %487 = vmatpush1.msra.mxu0 0.0
        %488 = vmatprep.subr.mxu0 0.0
        %489 = vmatpush1.msra.mxu0 0.0
        %490 = vmatprep.subr.mxu0 0.0
        %491 = vmatpush1.msra.mxu0 0.0
        %492 = vmatprep.subr.mxu0 0.0
        %493 = vmatpush1.msra.mxu0 0.0
        %494 = vmatprep.subr.mxu0 0.0
        %495 = vmatpush1.msra.mxu0 0.0
        %496 = vmatprep.subr.mxu0 0.0
        %497 = vmatpush1.msra.mxu0 0.0
        %498 = vmatprep.subr.mxu0 0.0
        %499 = vmatpush1.msra.mxu0 0.0
        %500 = vmatprep.subr.mxu0 0.0
        %501 = vmatpush1.msra.mxu0 0.0
        %502 = vmatprep.subr.mxu0 0.0
        %503 = vmatpush1.msra.mxu0 0.0
        %504 = vmatprep.mubr.f32.mxu0 0.0
        %505 = vmatmul.mubr.f32.gmra.mrb[0].mxu0 %v438
        %v506 = vpop.f32.mrb[0].mxu0
        %v507 = vadd.f32 %v379, %v506
        %v508 = vpop.f32.mrb[0].mxu0
        %509 = vdwg.mxu0
        %510 = vmatprep.subr.mxu0 0.0
        %511 = vmatpush1.msra.mxu0 %v308
        %512 = vmatprep.subr.mxu0 0.0
        %513 = vmatpush1.msra.mxu0 %v309
        %514 = vmatprep.subr.mxu0 0.0
        %515 = vmatpush1.msra.mxu0 %v310
        %516 = vmatprep.subr.mxu0 0.0
        %517 = vmatpush1.msra.mxu0 %v311
        %518 = vmatprep.subr.mxu0 0.0
        %519 = vmatpush1.msra.mxu0 0.0
        %520 = vmatprep.subr.mxu0 0.0
        %521 = vmatpush1.msra.mxu0 0.0
        %522 = vmatprep.subr.mxu0 0.0
        %523 = vmatpush1.msra.mxu0 0.0
        %524 = vmatprep.subr.mxu0 0.0
        %525 = vmatpush1.msra.mxu0 0.0
        %526 = vmatprep.subr.mxu0 0.0
        %527 = vmatpush1.msra.mxu0 0.0
        %528 = vmatprep.subr.mxu0 0.0
        %529 = vmatpush1.msra.mxu0 0.0
        %530 = vmatprep.subr.mxu0 0.0
        %531 = vmatpush1.msra.mxu0 0.0
        %532 = vmatprep.subr.mxu0 0.0
        %533 = vmatpush1.msra.mxu0 0.0
        %534 = vmatprep.subr.mxu0 0.0
        %535 = vmatpush1.msra.mxu0 0.0
        %536 = vmatprep.subr.mxu0 0.0
        %537 = vmatpush1.msra.mxu0 0.0
        %538 = vmatprep.subr.mxu0 0.0
        %539 = vmatpush1.msra.mxu0 0.0
        %540 = vmatprep.subr.mxu0 0.0
        %541 = vmatpush1.msra.mxu0 0.0
        %542 = vmatprep.subr.mxu0 0.0
        %543 = vmatpush1.msra.mxu0 0.0
        %544 = vmatprep.subr.mxu0 0.0
        %545 = vmatpush1.msra.mxu0 0.0
        %546 = vmatprep.subr.mxu0 0.0
        %547 = vmatpush1.msra.mxu0 0.0
        %548 = vmatprep.subr.mxu0 0.0
        %549 = vmatpush1.msra.mxu0 0.0
        %550 = vmatprep.subr.mxu0 0.0
        %551 = vmatpush1.msra.mxu0 0.0
        %552 = vmatprep.subr.mxu0 0.0
        %553 = vmatpush1.msra.mxu0 0.0
        %554 = vmatprep.subr.mxu0 0.0
        %555 = vmatpush1.msra.mxu0 0.0
        %556 = vmatprep.subr.mxu0 0.0
        %557 = vmatpush1.msra.mxu0 0.0
        %558 = vmatprep.subr.mxu0 0.0
        %559 = vmatpush1.msra.mxu0 0.0
        %560 = vmatprep.subr.mxu0 0.0
        %561 = vmatpush1.msra.mxu0 0.0
        %562 = vmatprep.subr.mxu0 0.0
        %563 = vmatpush1.msra.mxu0 0.0
        %564 = vmatprep.subr.mxu0 0.0
        %565 = vmatpush1.msra.mxu0 0.0
        %566 = vmatprep.subr.mxu0 0.0
        %567 = vmatpush1.msra.mxu0 0.0
        %568 = vmatprep.subr.mxu0 0.0
        %569 = vmatpush1.msra.mxu0 0.0
        %570 = vmatprep.subr.mxu0 0.0
        %571 = vmatpush1.msra.mxu0 0.0
        %572 = vmatprep.subr.mxu0 0.0
        %573 = vmatpush1.msra.mxu0 0.0
        %574 = vmatprep.mubr.f32.mxu0 0.0
        %575 = vmatmul.mubr.f32.gmra.mrb[0].mxu0 %v438
        %v576 = vpop.f32.mrb[0].mxu0
        %v577 = vadd.f32 %v383, %v576
        %v578 = vpop.f32.mrb[0].mxu0
        %579 = vdwg.mxu0
        %580 = vmatprep.subr.mxu0 0.0
        %581 = vmatpush1.msra.mxu0 %v312
        %582 = vmatprep.subr.mxu0 0.0
        %583 = vmatpush1.msra.mxu0 %v313
        %584 = vmatprep.subr.mxu0 0.0
        %585 = vmatpush1.msra.mxu0 %v314
        %586 = vmatprep.subr.mxu0 0.0
        %587 = vmatpush1.msra.mxu0 %v315
        %588 = vmatprep.subr.mxu0 0.0
        %589 = vmatpush1.msra.mxu0 0.0
        %590 = vmatprep.subr.mxu0 0.0
        %591 = vmatpush1.msra.mxu0 0.0
        %592 = vmatprep.subr.mxu0 0.0
        %593 = vmatpush1.msra.mxu0 0.0
        %594 = vmatprep.subr.mxu0 0.0
        %595 = vmatpush1.msra.mxu0 0.0
        %596 = vmatprep.subr.mxu0 0.0
        %597 = vmatpush1.msra.mxu0 0.0
        %598 = vmatprep.subr.mxu0 0.0
        %599 = vmatpush1.msra.mxu0 0.0
        %600 = vmatprep.subr.mxu0 0.0
        %601 = vmatpush1.msra.mxu0 0.0
        %602 = vmatprep.subr.mxu0 0.0
        %603 = vmatpush1.msra.mxu0 0.0
        %604 = vmatprep.subr.mxu0 0.0
        %605 = vmatpush1.msra.mxu0 0.0
        %606 = vmatprep.subr.mxu0 0.0
        %607 = vmatpush1.msra.mxu0 0.0
        %608 = vmatprep.subr.mxu0 0.0
        %609 = vmatpush1.msra.mxu0 0.0
        %610 = vmatprep.subr.mxu0 0.0
        %611 = vmatpush1.msra.mxu0 0.0
        %612 = vmatprep.subr.mxu0 0.0
        %613 = vmatpush1.msra.mxu0 0.0
        %614 = vmatprep.subr.mxu0 0.0
        %615 = vmatpush1.msra.mxu0 0.0
        %616 = vmatprep.subr.mxu0 0.0
        %617 = vmatpush1.msra.mxu0 0.0
        %618 = vmatprep.subr.mxu0 0.0
        %619 = vmatpush1.msra.mxu0 0.0
        %620 = vmatprep.subr.mxu0 0.0
        %621 = vmatpush1.msra.mxu0 0.0
        %622 = vmatprep.subr.mxu0 0.0
        %623 = vmatpush1.msra.mxu0 0.0
        %624 = vmatprep.subr.mxu0 0.0
        %625 = vmatpush1.msra.mxu0 0.0
        %626 = vmatprep.subr.mxu0 0.0
        %627 = vmatpush1.msra.mxu0 0.0
        %628 = vmatprep.subr.mxu0 0.0
        %629 = vmatpush1.msra.mxu0 0.0
        %630 = vmatprep.subr.mxu0 0.0
        %631 = vmatpush1.msra.mxu0 0.0
        %632 = vmatprep.subr.mxu0 0.0
        %633 = vmatpush1.msra.mxu0 0.0
        %634 = vmatprep.subr.mxu0 0.0
        %635 = vmatpush1.msra.mxu0 0.0
        %636 = vmatprep.subr.mxu0 0.0
        %637 = vmatpush1.msra.mxu0 0.0
        %638 = vmatprep.subr.mxu0 0.0
        %639 = vmatpush1.msra.mxu0 0.0
        %640 = vmatprep.subr.mxu0 0.0
        %641 = vmatpush1.msra.mxu0 0.0
        %642 = vmatprep.subr.mxu0 0.0
        %643 = vmatpush1.msra.mxu0 0.0
        %644 = vmatprep.mubr.f32.mxu0 0.0
        %645 = vmatmul.mubr.f32.gmra.mrb[0].mxu0 %v438
        %v646 = vpop.f32.mrb[0].mxu0
        %v647 = vadd.f32 %v387, %v646
        %v648 = vpop.f32.mrb[0].mxu0
        %649 = vdwg.mxu0
        %650 = vmatprep.subr.mxu0 0.0
        %651 = vmatpush1.msra.mxu0 %v316
        %652 = vmatprep.subr.mxu0 0.0
        %653 = vmatpush1.msra.mxu0 %v317
        %654 = vmatprep.subr.mxu0 0.0
        %655 = vmatpush1.msra.mxu0 %v318
        %656 = vmatprep.subr.mxu0 0.0
        %657 = vmatpush1.msra.mxu0 %v319
        %658 = vmatprep.subr.mxu0 0.0
        %659 = vmatpush1.msra.mxu0 0.0
        %660 = vmatprep.subr.mxu0 0.0
        %661 = vmatpush1.msra.mxu0 0.0
        %662 = vmatprep.subr.mxu0 0.0
        %663 = vmatpush1.msra.mxu0 0.0
        %664 = vmatprep.subr.mxu0 0.0
        %665 = vmatpush1.msra.mxu0 0.0
        %666 = vmatprep.subr.mxu0 0.0
        %667 = vmatpush1.msra.mxu0 0.0
        %668 = vmatprep.subr.mxu0 0.0
        %669 = vmatpush1.msra.mxu0 0.0
        %670 = vmatprep.subr.mxu0 0.0
        %671 = vmatpush1.msra.mxu0 0.0
        %672 = vmatprep.subr.mxu0 0.0
        %673 = vmatpush1.msra.mxu0 0.0
        %674 = vmatprep.subr.mxu0 0.0
        %675 = vmatpush1.msra.mxu0 0.0
        %676 = vmatprep.subr.mxu0 0.0
        %677 = vmatpush1.msra.mxu0 0.0
        %678 = vmatprep.subr.mxu0 0.0
        %679 = vmatpush1.msra.mxu0 0.0
        %680 = vmatprep.subr.mxu0 0.0
        %681 = vmatpush1.msra.mxu0 0.0
        %682 = vmatprep.subr.mxu0 0.0
        %683 = vmatpush1.msra.mxu0 0.0
        %684 = vmatprep.subr.mxu0 0.0
        %685 = vmatpush1.msra.mxu0 0.0
        %686 = vmatprep.subr.mxu0 0.0
        %687 = vmatpush1.msra.mxu0 0.0
        %688 = vmatprep.subr.mxu0 0.0
        %689 = vmatpush1.msra.mxu0 0.0
        %690 = vmatprep.subr.mxu0 0.0
        %691 = vmatpush1.msra.mxu0 0.0
        %692 = vmatprep.subr.mxu0 0.0
        %693 = vmatpush1.msra.mxu0 0.0
        %694 = vmatprep.subr.mxu0 0.0
        %695 = vmatpush1.msra.mxu0 0.0
        %696 = vmatprep.subr.mxu0 0.0
        %697 = vmatpush1.msra.mxu0 0.0
        %698 = vmatprep.subr.mxu0 0.0
        %699 = vmatpush1.msra.mxu0 0.0
        %700 = vmatprep.subr.mxu0 0.0
        %701 = vmatpush1.msra.mxu0 0.0
        %702 = vmatprep.subr.mxu0 0.0
        %703 = vmatpush1.msra.mxu0 0.0
        %704 = vmatprep.subr.mxu0 0.0
        %705 = vmatpush1.msra.mxu0 0.0
        %706 = vmatprep.subr.mxu0 0.0
        %707 = vmatpush1.msra.mxu0 0.0
        %708 = vmatprep.subr.mxu0 0.0
        %709 = vmatpush1.msra.mxu0 0.0
        %710 = vmatprep.subr.mxu0 0.0
        %711 = vmatpush1.msra.mxu0 0.0
        %712 = vmatprep.subr.mxu0 0.0
        %713 = vmatpush1.msra.mxu0 0.0
        %714 = vmatprep.mubr.f32.mxu0 0.0
        %715 = vmatmul.mubr.f32.gmra.mrb[0].mxu0 %v438
        %v716 = vpop.f32.mrb[0].mxu0
        %v717 = vadd.f32 %v391, %v716
        %v718 = vpop.f32.mrb[0].mxu0
        %719 = vdwg.mxu0
        %720 = vmatprep.subr.mxu0 0.0
        %721 = vmatpush1.msra.mxu0 %v320
        %722 = vmatprep.subr.mxu0 0.0
        %723 = vmatpush1.msra.mxu0 %v321
        %724 = vmatprep.subr.mxu0 0.0
        %725 = vmatpush1.msra.mxu0 %v322
        %726 = vmatprep.subr.mxu0 0.0
        %727 = vmatpush1.msra.mxu0 %v323
        %728 = vmatprep.subr.mxu0 0.0
        %729 = vmatpush1.msra.mxu0 0.0
        %730 = vmatprep.subr.mxu0 0.0
        %731 = vmatpush1.msra.mxu0 0.0
        %732 = vmatprep.subr.mxu0 0.0
        %733 = vmatpush1.msra.mxu0 0.0
        %734 = vmatprep.subr.mxu0 0.0
        %735 = vmatpush1.msra.mxu0 0.0
        %736 = vmatprep.subr.mxu0 0.0
        %737 = vmatpush1.msra.mxu0 0.0
        %738 = vmatprep.subr.mxu0 0.0
        %739 = vmatpush1.msra.mxu0 0.0
        %740 = vmatprep.subr.mxu0 0.0
        %741 = vmatpush1.msra.mxu0 0.0
        %742 = vmatprep.subr.mxu0 0.0
        %743 = vmatpush1.msra.mxu0 0.0
        %744 = vmatprep.subr.mxu0 0.0
        %745 = vmatpush1.msra.mxu0 0.0
        %746 = vmatprep.subr.mxu0 0.0
        %747 = vmatpush1.msra.mxu0 0.0
        %748 = vmatprep.subr.mxu0 0.0
        %749 = vmatpush1.msra.mxu0 0.0
        %750 = vmatprep.subr.mxu0 0.0
        %751 = vmatpush1.msra.mxu0 0.0
        %752 = vmatprep.subr.mxu0 0.0
        %753 = vmatpush1.msra.mxu0 0.0
        %754 = vmatprep.subr.mxu0 0.0
        %755 = vmatpush1.msra.mxu0 0.0
        %756 = vmatprep.subr.mxu0 0.0
        %757 = vmatpush1.msra.mxu0 0.0
        %758 = vmatprep.subr.mxu0 0.0
        %759 = vmatpush1.msra.mxu0 0.0
        %760 = vmatprep.subr.mxu0 0.0
        %761 = vmatpush1.msra.mxu0 0.0
        %762 = vmatprep.subr.mxu0 0.0
        %763 = vmatpush1.msra.mxu0 0.0
        %764 = vmatprep.subr.mxu0 0.0
        %765 = vmatpush1.msra.mxu0 0.0
        %766 = vmatprep.subr.mxu0 0.0
        %767 = vmatpush1.msra.mxu0 0.0
        %768 = vmatprep.subr.mxu0 0.0
        %769 = vmatpush1.msra.mxu0 0.0
        %770 = vmatprep.subr.mxu0 0.0
        %771 = vmatpush1.msra.mxu0 0.0
        %772 = vmatprep.subr.mxu0 0.0
        %773 = vmatpush1.msra.mxu0 0.0
        %774 = vmatprep.subr.mxu0 0.0
        %775 = vmatpush1.msra.mxu0 0.0
        %776 = vmatprep.subr.mxu0 0.0
        %777 = vmatpush1.msra.mxu0 0.0
        %778 = vmatprep.subr.mxu0 0.0
        %779 = vmatpush1.msra.mxu0 0.0
        %780 = vmatprep.subr.mxu0 0.0
        %781 = vmatpush1.msra.mxu0 0.0
        %782 = vmatprep.subr.mxu0 0.0
        %783 = vmatpush1.msra.mxu0 0.0
        %784 = vmatprep.mubr.f32.mxu0 0.0
        %785 = vmatmul.mubr.f32.gmra.mrb[0].mxu0 %v438
        %v786 = vpop.f32.mrb[0].mxu0
        %v787 = vadd.f32 %v395, %v786
        %v788 = vpop.f32.mrb[0].mxu0
        %789 = vdwg.mxu0
        %790 = vmatprep.subr.mxu0 0.0
        %791 = vmatpush1.msra.mxu0 %v324
        %792 = vmatprep.subr.mxu0 0.0
        %793 = vmatpush1.msra.mxu0 %v325
        %794 = vmatprep.subr.mxu0 0.0
        %795 = vmatpush1.msra.mxu0 %v326
        %796 = vmatprep.subr.mxu0 0.0
        %797 = vmatpush1.msra.mxu0 %v327
        %798 = vmatprep.subr.mxu0 0.0
        %799 = vmatpush1.msra.mxu0 0.0
        %800 = vmatprep.subr.mxu0 0.0
        %801 = vmatpush1.msra.mxu0 0.0
        %802 = vmatprep.subr.mxu0 0.0
        %803 = vmatpush1.msra.mxu0 0.0
        %804 = vmatprep.subr.mxu0 0.0
        %805 = vmatpush1.msra.mxu0 0.0
        %806 = vmatprep.subr.mxu0 0.0
        %807 = vmatpush1.msra.mxu0 0.0
        %808 = vmatprep.subr.mxu0 0.0
        %809 = vmatpush1.msra.mxu0 0.0
        %810 = vmatprep.subr.mxu0 0.0
        %811 = vmatpush1.msra.mxu0 0.0
        %812 = vmatprep.subr.mxu0 0.0
        %813 = vmatpush1.msra.mxu0 0.0
        %814 = vmatprep.subr.mxu0 0.0
        %815 = vmatpush1.msra.mxu0 0.0
        %816 = vmatprep.subr.mxu0 0.0
        %817 = vmatpush1.msra.mxu0 0.0
        %818 = vmatprep.subr.mxu0 0.0
        %819 = vmatpush1.msra.mxu0 0.0
        %820 = vmatprep.subr.mxu0 0.0
        %821 = vmatpush1.msra.mxu0 0.0
        %822 = vmatprep.subr.mxu0 0.0
        %823 = vmatpush1.msra.mxu0 0.0
        %824 = vmatprep.subr.mxu0 0.0
        %825 = vmatpush1.msra.mxu0 0.0
        %826 = vmatprep.subr.mxu0 0.0
        %827 = vmatpush1.msra.mxu0 0.0
        %828 = vmatprep.subr.mxu0 0.0
        %829 = vmatpush1.msra.mxu0 0.0
        %830 = vmatprep.subr.mxu0 0.0
        %831 = vmatpush1.msra.mxu0 0.0
        %832 = vmatprep.subr.mxu0 0.0
        %833 = vmatpush1.msra.mxu0 0.0
        %834 = vmatprep.subr.mxu0 0.0
        %835 = vmatpush1.msra.mxu0 0.0
        %836 = vmatprep.subr.mxu0 0.0
        %837 = vmatpush1.msra.mxu0 0.0
        %838 = vmatprep.subr.mxu0 0.0
        %839 = vmatpush1.msra.mxu0 0.0
        %840 = vmatprep.subr.mxu0 0.0
        %841 = vmatpush1.msra.mxu0 0.0
        %842 = vmatprep.subr.mxu0 0.0
        %843 = vmatpush1.msra.mxu0 0.0
        %844 = vmatprep.subr.mxu0 0.0
        %845 = vmatpush1.msra.mxu0 0.0
        %846 = vmatprep.subr.mxu0 0.0
        %847 = vmatpush1.msra.mxu0 0.0
        %848 = vmatprep.subr.mxu0 0.0
        %849 = vmatpush1.msra.mxu0 0.0
        %850 = vmatprep.subr.mxu0 0.0
        %851 = vmatpush1.msra.mxu0 0.0
        %852 = vmatprep.subr.mxu0 0.0
        %853 = vmatpush1.msra.mxu0 0.0
        %854 = vmatprep.mubr.f32.mxu0 0.0
        %855 = vmatmul.mubr.f32.gmra.mrb[0].mxu0 %v438
        %v856 = vpop.f32.mrb[0].mxu0
        %v857 = vadd.f32 %v399, %v856
        %v858 = vpop.f32.mrb[0].mxu0
        %859 = vdwg.mxu0
        %860 = vmatprep.subr.mxu0 0.0
        %861 = vmatpush1.msra.mxu0 %v328
        %862 = vmatprep.subr.mxu0 0.0
        %863 = vmatpush1.msra.mxu0 %v329
        %864 = vmatprep.subr.mxu0 0.0
        %865 = vmatpush1.msra.mxu0 %v330
        %866 = vmatprep.subr.mxu0 0.0
        %867 = vmatpush1.msra.mxu0 %v331
        %868 = vmatprep.subr.mxu0 0.0
        %869 = vmatpush1.msra.mxu0 0.0
        %870 = vmatprep.subr.mxu0 0.0
        %871 = vmatpush1.msra.mxu0 0.0
        %872 = vmatprep.subr.mxu0 0.0
        %873 = vmatpush1.msra.mxu0 0.0
        %874 = vmatprep.subr.mxu0 0.0
        %875 = vmatpush1.msra.mxu0 0.0
        %876 = vmatprep.subr.mxu0 0.0
        %877 = vmatpush1.msra.mxu0 0.0
        %878 = vmatprep.subr.mxu0 0.0
        %879 = vmatpush1.msra.mxu0 0.0
        %880 = vmatprep.subr.mxu0 0.0
        %881 = vmatpush1.msra.mxu0 0.0
        %882 = vmatprep.subr.mxu0 0.0
        %883 = vmatpush1.msra.mxu0 0.0
        %884 = vmatprep.subr.mxu0 0.0
        %885 = vmatpush1.msra.mxu0 0.0
        %886 = vmatprep.subr.mxu0 0.0
        %887 = vmatpush1.msra.mxu0 0.0
        %888 = vmatprep.subr.mxu0 0.0
        %889 = vmatpush1.msra.mxu0 0.0
        %890 = vmatprep.subr.mxu0 0.0
        %891 = vmatpush1.msra.mxu0 0.0
        %892 = vmatprep.subr.mxu0 0.0
        %893 = vmatpush1.msra.mxu0 0.0
        %894 = vmatprep.subr.mxu0 0.0
        %895 = vmatpush1.msra.mxu0 0.0
        %896 = vmatprep.subr.mxu0 0.0
        %897 = vmatpush1.msra.mxu0 0.0
        %898 = vmatprep.subr.mxu0 0.0
        %899 = vmatpush1.msra.mxu0 0.0
        %900 = vmatprep.subr.mxu0 0.0
        %901 = vmatpush1.msra.mxu0 0.0
        %902 = vmatprep.subr.mxu0 0.0
        %903 = vmatpush1.msra.mxu0 0.0
        %904 = vmatprep.subr.mxu0 0.0
        %905 = vmatpush1.msra.mxu0 0.0
        %906 = vmatprep.subr.mxu0 0.0
        %907 = vmatpush1.msra.mxu0 0.0
        %908 = vmatprep.subr.mxu0 0.0
        %909 = vmatpush1.msra.mxu0 0.0
        %910 = vmatprep.subr.mxu0 0.0
        %911 = vmatpush1.msra.mxu0 0.0
        %912 = vmatprep.subr.mxu0 0.0
        %913 = vmatpush1.msra.mxu0 0.0
        %914 = vmatprep.subr.mxu0 0.0
        %915 = vmatpush1.msra.mxu0 0.0
        %916 = vmatprep.subr.mxu0 0.0
        %917 = vmatpush1.msra.mxu0 0.0
        %918 = vmatprep.subr.mxu0 0.0
        %919 = vmatpush1.msra.mxu0 0.0
        %920 = vmatprep.subr.mxu0 0.0
        %921 = vmatpush1.msra.mxu0 0.0
        %922 = vmatprep.subr.mxu0 0.0
        %923 = vmatpush1.msra.mxu0 0.0
        %924 = vmatprep.mubr.f32.mxu0 0.0
        %925 = vmatmul.mubr.f32.gmra.mrb[0].mxu0 %v438
        %v926 = vpop.f32.mrb[0].mxu0
        %v927 = vadd.f32 %v403, %v926
        %v928 = vpop.f32.mrb[0].mxu0
        %929 = vdwg.mxu0
        %930 = vmatprep.subr.mxu0 0.0
        %931 = vmatpush1.msra.mxu0 %v332
        %932 = vmatprep.subr.mxu0 0.0
        %933 = vmatpush1.msra.mxu0 %v333
        %934 = vmatprep.subr.mxu0 0.0
        %935 = vmatpush1.msra.mxu0 %v334
        %936 = vmatprep.subr.mxu0 0.0
        %937 = vmatpush1.msra.mxu0 %v335
        %938 = vmatprep.subr.mxu0 0.0
        %939 = vmatpush1.msra.mxu0 0.0
        %940 = vmatprep.subr.mxu0 0.0
        %941 = vmatpush1.msra.mxu0 0.0
        %942 = vmatprep.subr.mxu0 0.0
        %943 = vmatpush1.msra.mxu0 0.0
        %944 = vmatprep.subr.mxu0 0.0
        %945 = vmatpush1.msra.mxu0 0.0
        %946 = vmatprep.subr.mxu0 0.0
        %947 = vmatpush1.msra.mxu0 0.0
        %948 = vmatprep.subr.mxu0 0.0
        %949 = vmatpush1.msra.mxu0 0.0
        %950 = vmatprep.subr.mxu0 0.0
        %951 = vmatpush1.msra.mxu0 0.0
        %952 = vmatprep.subr.mxu0 0.0
        %953 = vmatpush1.msra.mxu0 0.0
        %954 = vmatprep.subr.mxu0 0.0
        %955 = vmatpush1.msra.mxu0 0.0
        %956 = vmatprep.subr.mxu0 0.0
        %957 = vmatpush1.msra.mxu0 0.0
        %958 = vmatprep.subr.mxu0 0.0
        %959 = vmatpush1.msra.mxu0 0.0
        %960 = vmatprep.subr.mxu0 0.0
        %961 = vmatpush1.msra.mxu0 0.0
        %962 = vmatprep.subr.mxu0 0.0
        %963 = vmatpush1.msra.mxu0 0.0
        %964 = vmatprep.subr.mxu0 0.0
        %965 = vmatpush1.msra.mxu0 0.0
        %966 = vmatprep.subr.mxu0 0.0
        %967 = vmatpush1.msra.mxu0 0.0
        %968 = vmatprep.subr.mxu0 0.0
        %969 = vmatpush1.msra.mxu0 0.0
        %970 = vmatprep.subr.mxu0 0.0
        %971 = vmatpush1.msra.mxu0 0.0
        %972 = vmatprep.subr.mxu0 0.0
        %973 = vmatpush1.msra.mxu0 0.0
        %974 = vmatprep.subr.mxu0 0.0
        %975 = vmatpush1.msra.mxu0 0.0
        %976 = vmatprep.subr.mxu0 0.0
        %977 = vmatpush1.msra.mxu0 0.0
        %978 = vmatprep.subr.mxu0 0.0
        %979 = vmatpush1.msra.mxu0 0.0
        %980 = vmatprep.subr.mxu0 0.0
        %981 = vmatpush1.msra.mxu0 0.0
        %982 = vmatprep.subr.mxu0 0.0
        %983 = vmatpush1.msra.mxu0 0.0
        %984 = vmatprep.subr.mxu0 0.0
        %985 = vmatpush1.msra.mxu0 0.0
        %986 = vmatprep.subr.mxu0 0.0
        %987 = vmatpush1.msra.mxu0 0.0
        %988 = vmatprep.subr.mxu0 0.0
        %989 = vmatpush1.msra.mxu0 0.0
        %990 = vmatprep.subr.mxu0 0.0
        %991 = vmatpush1.msra.mxu0 0.0
        %992 = vmatprep.subr.mxu0 0.0
        %993 = vmatpush1.msra.mxu0 0.0
        %994 = vmatprep.mubr.f32.mxu0 0.0
        %995 = vmatmul.mubr.f32.gmra.mrb[0].mxu0 %v438
        %v996 = vpop.f32.mrb[0].mxu0
        %v997 = vadd.f32 %v407, %v996
        %v998 = vpop.f32.mrb[0].mxu0
        %999 = vdwg.mxu0
        %1000 = vmatprep.subr.mxu0 0.0
        %1001 = vmatpush1.msra.mxu0 %v336
        %1002 = vmatprep.subr.mxu0 0.0
        %1003 = vmatpush1.msra.mxu0 %v337
        %1004 = vmatprep.subr.mxu0 0.0
        %1005 = vmatpush1.msra.mxu0 %v338
        %1006 = vmatprep.subr.mxu0 0.0
        %1007 = vmatpush1.msra.mxu0 %v339
        %1008 = vmatprep.subr.mxu0 0.0
        %1009 = vmatpush1.msra.mxu0 0.0
        %1010 = vmatprep.subr.mxu0 0.0
        %1011 = vmatpush1.msra.mxu0 0.0
        %1012 = vmatprep.subr.mxu0 0.0
        %1013 = vmatpush1.msra.mxu0 0.0
        %1014 = vmatprep.subr.mxu0 0.0
        %1015 = vmatpush1.msra.mxu0 0.0
        %1016 = vmatprep.subr.mxu0 0.0
        %1017 = vmatpush1.msra.mxu0 0.0
        %1018 = vmatprep.subr.mxu0 0.0
        %1019 = vmatpush1.msra.mxu0 0.0
        %1020 = vmatprep.subr.mxu0 0.0
        %1021 = vmatpush1.msra.mxu0 0.0
        %1022 = vmatprep.subr.mxu0 0.0
        %1023 = vmatpush1.msra.mxu0 0.0
        %1024 = vmatprep.subr.mxu0 0.0
        %1025 = vmatpush1.msra.mxu0 0.0
        %1026 = vmatprep.subr.mxu0 0.0
        %1027 = vmatpush1.msra.mxu0 0.0
        %1028 = vmatprep.subr.mxu0 0.0
        %1029 = vmatpush1.msra.mxu0 0.0
        %1030 = vmatprep.subr.mxu0 0.0
        %1031 = vmatpush1.msra.mxu0 0.0
        %1032 = vmatprep.subr.mxu0 0.0
        %1033 = vmatpush1.msra.mxu0 0.0
        %1034 = vmatprep.subr.mxu0 0.0
        %1035 = vmatpush1.msra.mxu0 0.0
        %1036 = vmatprep.subr.mxu0 0.0
        %1037 = vmatpush1.msra.mxu0 0.0
        %1038 = vmatprep.subr.mxu0 0.0
        %1039 = vmatpush1.msra.mxu0 0.0
        %1040 = vmatprep.subr.mxu0 0.0
        %1041 = vmatpush1.msra.mxu0 0.0
        %1042 = vmatprep.subr.mxu0 0.0
        %1043 = vmatpush1.msra.mxu0 0.0
        %1044 = vmatprep.subr.mxu0 0.0
        %1045 = vmatpush1.msra.mxu0 0.0
        %1046 = vmatprep.subr.mxu0 0.0
        %1047 = vmatpush1.msra.mxu0 0.0
        %1048 = vmatprep.subr.mxu0 0.0
        %1049 = vmatpush1.msra.mxu0 0.0
        %1050 = vmatprep.subr.mxu0 0.0
        %1051 = vmatpush1.msra.mxu0 0.0
        %1052 = vmatprep.subr.mxu0 0.0
        %1053 = vmatpush1.msra.mxu0 0.0
        %1054 = vmatprep.subr.mxu0 0.0
        %1055 = vmatpush1.msra.mxu0 0.0
        %1056 = vmatprep.subr.mxu0 0.0
        %1057 = vmatpush1.msra.mxu0 0.0
        %1058 = vmatprep.subr.mxu0 0.0
        %1059 = vmatpush1.msra.mxu0 0.0
        %1060 = vmatprep.subr.mxu0 0.0
        %1061 = vmatpush1.msra.mxu0 0.0
        %1062 = vmatprep.subr.mxu0 0.0
        %1063 = vmatpush1.msra.mxu0 0.0
        %1064 = vmatprep.mubr.f32.mxu0 0.0
        %1065 = vmatmul.mubr.f32.gmra.mrb[0].mxu0 %v438
        %v1066 = vpop.f32.mrb[0].mxu0
        %v1067 = vadd.f32 %v411, %v1066
        %v1068 = vpop.f32.mrb[0].mxu0
        %1069 = vdwg.mxu0
        %1070 = vmatprep.subr.mxu0 0.0
        %1071 = vmatpush1.msra.mxu0 %v340
        %1072 = vmatprep.subr.mxu0 0.0
        %1073 = vmatpush1.msra.mxu0 %v341
        %1074 = vmatprep.subr.mxu0 0.0
        %1075 = vmatpush1.msra.mxu0 %v342
        %1076 = vmatprep.subr.mxu0 0.0
        %1077 = vmatpush1.msra.mxu0 %v343
        %1078 = vmatprep.subr.mxu0 0.0
        %1079 = vmatpush1.msra.mxu0 0.0
        %1080 = vmatprep.subr.mxu0 0.0
        %1081 = vmatpush1.msra.mxu0 0.0
        %1082 = vmatprep.subr.mxu0 0.0
        %1083 = vmatpush1.msra.mxu0 0.0
        %1084 = vmatprep.subr.mxu0 0.0
        %1085 = vmatpush1.msra.mxu0 0.0
        %1086 = vmatprep.subr.mxu0 0.0
        %1087 = vmatpush1.msra.mxu0 0.0
        %1088 = vmatprep.subr.mxu0 0.0
        %1089 = vmatpush1.msra.mxu0 0.0
        %1090 = vmatprep.subr.mxu0 0.0
        %1091 = vmatpush1.msra.mxu0 0.0
        %1092 = vmatprep.subr.mxu0 0.0
        %1093 = vmatpush1.msra.mxu0 0.0
        %1094 = vmatprep.subr.mxu0 0.0
        %1095 = vmatpush1.msra.mxu0 0.0
        %1096 = vmatprep.subr.mxu0 0.0
        %1097 = vmatpush1.msra.mxu0 0.0
        %1098 = vmatprep.subr.mxu0 0.0
        %1099 = vmatpush1.msra.mxu0 0.0
        %1100 = vmatprep.subr.mxu0 0.0
        %1101 = vmatpush1.msra.mxu0 0.0
        %1102 = vmatprep.subr.mxu0 0.0
        %1103 = vmatpush1.msra.mxu0 0.0
        %1104 = vmatprep.subr.mxu0 0.0
        %1105 = vmatpush1.msra.mxu0 0.0
        %1106 = vmatprep.subr.mxu0 0.0
        %1107 = vmatpush1.msra.mxu0 0.0
        %1108 = vmatprep.subr.mxu0 0.0
        %1109 = vmatpush1.msra.mxu0 0.0
        %1110 = vmatprep.subr.mxu0 0.0
        %1111 = vmatpush1.msra.mxu0 0.0
        %1112 = vmatprep.subr.mxu0 0.0
        %1113 = vmatpush1.msra.mxu0 0.0
        %1114 = vmatprep.subr.mxu0 0.0
        %1115 = vmatpush1.msra.mxu0 0.0
        %1116 = vmatprep.subr.mxu0 0.0
        %1117 = vmatpush1.msra.mxu0 0.0
        %1118 = vmatprep.subr.mxu0 0.0
        %1119 = vmatpush1.msra.mxu0 0.0
        %1120 = vmatprep.subr.mxu0 0.0
        %1121 = vmatpush1.msra.mxu0 0.0
        %1122 = vmatprep.subr.mxu0 0.0
        %1123 = vmatpush1.msra.mxu0 0.0
        %1124 = vmatprep.subr.mxu0 0.0
        %1125 = vmatpush1.msra.mxu0 0.0
        %1126 = vmatprep.subr.mxu0 0.0
        %1127 = vmatpush1.msra.mxu0 0.0
        %1128 = vmatprep.subr.mxu0 0.0
        %1129 = vmatpush1.msra.mxu0 0.0
        %1130 = vmatprep.subr.mxu0 0.0
        %1131 = vmatpush1.msra.mxu0 0.0
        %1132 = vmatprep.subr.mxu0 0.0
        %1133 = vmatpush1.msra.mxu0 0.0
        %1134 = vmatprep.mubr.f32.mxu0 0.0
        %1135 = vmatmul.mubr.f32.gmra.mrb[0].mxu0 %v438
        %v1136 = vpop.f32.mrb[0].mxu0
        %v1137 = vadd.f32 %v415, %v1136
        %v1138 = vpop.f32.mrb[0].mxu0
        %1139 = vdwg.mxu0
        %1140 = vmatprep.subr.mxu0 0.0
        %1141 = vmatpush1.msra.mxu0 %v344
        %1142 = vmatprep.subr.mxu0 0.0
        %1143 = vmatpush1.msra.mxu0 %v345
        %1144 = vmatprep.subr.mxu0 0.0
        %1145 = vmatpush1.msra.mxu0 %v346
        %1146 = vmatprep.subr.mxu0 0.0
        %1147 = vmatpush1.msra.mxu0 %v347
        %1148 = vmatprep.subr.mxu0 0.0
        %1149 = vmatpush1.msra.mxu0 0.0
        %1150 = vmatprep.subr.mxu0 0.0
        %1151 = vmatpush1.msra.mxu0 0.0
        %1152 = vmatprep.subr.mxu0 0.0
        %1153 = vmatpush1.msra.mxu0 0.0
        %1154 = vmatprep.subr.mxu0 0.0
        %1155 = vmatpush1.msra.mxu0 0.0
        %1156 = vmatprep.subr.mxu0 0.0
        %1157 = vmatpush1.msra.mxu0 0.0
        %1158 = vmatprep.subr.mxu0 0.0
        %1159 = vmatpush1.msra.mxu0 0.0
        %1160 = vmatprep.subr.mxu0 0.0
        %1161 = vmatpush1.msra.mxu0 0.0
        %1162 = vmatprep.subr.mxu0 0.0
        %1163 = vmatpush1.msra.mxu0 0.0
        %1164 = vmatprep.subr.mxu0 0.0
        %1165 = vmatpush1.msra.mxu0 0.0
        %1166 = vmatprep.subr.mxu0 0.0
        %1167 = vmatpush1.msra.mxu0 0.0
        %1168 = vmatprep.subr.mxu0 0.0
        %1169 = vmatpush1.msra.mxu0 0.0
        %1170 = vmatprep.subr.mxu0 0.0
        %1171 = vmatpush1.msra.mxu0 0.0
        %1172 = vmatprep.subr.mxu0 0.0
        %1173 = vmatpush1.msra.mxu0 0.0
        %1174 = vmatprep.subr.mxu0 0.0
        %1175 = vmatpush1.msra.mxu0 0.0
        %1176 = vmatprep.subr.mxu0 0.0
        %1177 = vmatpush1.msra.mxu0 0.0
        %1178 = vmatprep.subr.mxu0 0.0
        %1179 = vmatpush1.msra.mxu0 0.0
        %1180 = vmatprep.subr.mxu0 0.0
        %1181 = vmatpush1.msra.mxu0 0.0
        %1182 = vmatprep.subr.mxu0 0.0
        %1183 = vmatpush1.msra.mxu0 0.0
        %1184 = vmatprep.subr.mxu0 0.0
        %1185 = vmatpush1.msra.mxu0 0.0
        %1186 = vmatprep.subr.mxu0 0.0
        %1187 = vmatpush1.msra.mxu0 0.0
        %1188 = vmatprep.subr.mxu0 0.0
        %1189 = vmatpush1.msra.mxu0 0.0
        %1190 = vmatprep.subr.mxu0 0.0
        %1191 = vmatpush1.msra.mxu0 0.0
        %1192 = vmatprep.subr.mxu0 0.0
        %1193 = vmatpush1.msra.mxu0 0.0
        %1194 = vmatprep.subr.mxu0 0.0
        %1195 = vmatpush1.msra.mxu0 0.0
        %1196 = vmatprep.subr.mxu0 0.0
        %1197 = vmatpush1.msra.mxu0 0.0
        %1198 = vmatprep.subr.mxu0 0.0
        %1199 = vmatpush1.msra.mxu0 0.0
        %1200 = vmatprep.subr.mxu0 0.0
        %1201 = vmatpush1.msra.mxu0 0.0
        %1202 = vmatprep.subr.mxu0 0.0
        %1203 = vmatpush1.msra.mxu0 0.0
        %1204 = vmatprep.mubr.f32.mxu0 0.0
        %1205 = vmatmul.mubr.f32.gmra.mrb[0].mxu0 %v438
        %v1206 = vpop.f32.mrb[0].mxu0
        %v1207 = vadd.f32 %v419, %v1206
        %v1208 = vpop.f32.mrb[0].mxu0
        %1209 = vdwg.mxu0
        %1210 = vmatprep.subr.mxu0 0.0
        %1211 = vmatpush1.msra.mxu0 %v348
        %1212 = vmatprep.subr.mxu0 0.0
        %1213 = vmatpush1.msra.mxu0 %v349
        %1214 = vmatprep.subr.mxu0 0.0
        %1215 = vmatpush1.msra.mxu0 %v350
        %1216 = vmatprep.subr.mxu0 0.0
        %1217 = vmatpush1.msra.mxu0 %v351
        %1218 = vmatprep.subr.mxu0 0.0
        %1219 = vmatpush1.msra.mxu0 0.0
        %1220 = vmatprep.subr.mxu0 0.0
        %1221 = vmatpush1.msra.mxu0 0.0
        %1222 = vmatprep.subr.mxu0 0.0
        %1223 = vmatpush1.msra.mxu0 0.0
        %1224 = vmatprep.subr.mxu0 0.0
        %1225 = vmatpush1.msra.mxu0 0.0
        %1226 = vmatprep.subr.mxu0 0.0
        %1227 = vmatpush1.msra.mxu0 0.0
        %1228 = vmatprep.subr.mxu0 0.0
        %1229 = vmatpush1.msra.mxu0 0.0
        %1230 = vmatprep.subr.mxu0 0.0
        %1231 = vmatpush1.msra.mxu0 0.0
        %1232 = vmatprep.subr.mxu0 0.0
        %1233 = vmatpush1.msra.mxu0 0.0
        %1234 = vmatprep.subr.mxu0 0.0
        %1235 = vmatpush1.msra.mxu0 0.0
        %1236 = vmatprep.subr.mxu0 0.0
        %1237 = vmatpush1.msra.mxu0 0.0
        %1238 = vmatprep.subr.mxu0 0.0
        %1239 = vmatpush1.msra.mxu0 0.0
        %1240 = vmatprep.subr.mxu0 0.0
        %1241 = vmatpush1.msra.mxu0 0.0
        %1242 = vmatprep.subr.mxu0 0.0
        %1243 = vmatpush1.msra.mxu0 0.0
        %1244 = vmatprep.subr.mxu0 0.0
        %1245 = vmatpush1.msra.mxu0 0.0
        %1246 = vmatprep.subr.mxu0 0.0
        %1247 = vmatpush1.msra.mxu0 0.0
        %1248 = vmatprep.subr.mxu0 0.0
        %1249 = vmatpush1.msra.mxu0 0.0
        %1250 = vmatprep.subr.mxu0 0.0
        %1251 = vmatpush1.msra.mxu0 0.0
        %1252 = vmatprep.subr.mxu0 0.0
        %1253 = vmatpush1.msra.mxu0 0.0
        %1254 = vmatprep.subr.mxu0 0.0
        %1255 = vmatpush1.msra.mxu0 0.0
        %1256 = vmatprep.subr.mxu0 0.0
        %1257 = vmatpush1.msra.mxu0 0.0
        %1258 = vmatprep.subr.mxu0 0.0
        %1259 = vmatpush1.msra.mxu0 0.0
        %1260 = vmatprep.subr.mxu0 0.0
        %1261 = vmatpush1.msra.mxu0 0.0
        %1262 = vmatprep.subr.mxu0 0.0
        %1263 = vmatpush1.msra.mxu0 0.0
        %1264 = vmatprep.subr.mxu0 0.0
        %1265 = vmatpush1.msra.mxu0 0.0
        %1266 = vmatprep.subr.mxu0 0.0
        %1267 = vmatpush1.msra.mxu0 0.0
        %1268 = vmatprep.subr.mxu0 0.0
        %1269 = vmatpush1.msra.mxu0 0.0
        %1270 = vmatprep.subr.mxu0 0.0
        %1271 = vmatpush1.msra.mxu0 0.0
        %1272 = vmatprep.subr.mxu0 0.0
        %1273 = vmatpush1.msra.mxu0 0.0
        %1274 = vmatprep.mubr.f32.mxu0 0.0
        %1275 = vmatmul.mubr.f32.gmra.mrb[0].mxu0 %v438
        %v1276 = vpop.f32.mrb[0].mxu0
        %v1277 = vadd.f32 %v423, %v1276
        %v1278 = vpop.f32.mrb[0].mxu0
        %1279 = vdwg.mxu0
        %v1281 = vsel %vm436, %v507, 0
        %v1284 = vsel %vm436, %v787, 0
        %1286 = vmatprep.subr.mxu0 0.0
        %1287 = vmatpush1.xpose.msra.mxu0 %v1284
        %1288 = vmatprep.subr.mxu0 0.0
        %1289 = vmatpush1.xpose.msra.mxu0 0.0
        %1290 = vmatprep.subr.mxu0 0.0
        %1291 = vmatpush1.xpose.msra.mxu0 0.0
        %1292 = vmatprep.subr.mxu0 0.0
        %1293 = vmatpush1.xpose.msra.mxu0 0.0
        %1294 = vmatprep.subr.mxu0 0.0
        %1295 = vmatpush1.xpose.msra.mxu0 0.0
        %1296 = vmatprep.subr.mxu0 0.0
        %1297 = vmatpush1.xpose.msra.mxu0 0.0
        %1298 = vmatprep.subr.mxu0 0.0
        %1299 = vmatpush1.xpose.msra.mxu0 0.0
        %1300 = vmatprep.subr.mxu0 0.0
        %1301 = vmatpush1.xpose.msra.mxu0 0.0
        %1302 = vmatprep.subr.mxu0 0.0
        %1303 = vmatpush1.xpose.msra.mxu0 0.0
        %1304 = vmatprep.subr.mxu0 0.0
        %1305 = vmatpush1.xpose.msra.mxu0 0.0
        %1306 = vmatprep.subr.mxu0 0.0
        %1307 = vmatpush1.xpose.msra.mxu0 0.0
        %1308 = vmatprep.subr.mxu0 0.0
        %1309 = vmatpush1.xpose.msra.mxu0 0.0
        %1310 = vmatprep.subr.mxu0 0.0
        %1311 = vmatpush1.xpose.msra.mxu0 0.0
        %1312 = vmatprep.subr.mxu0 0.0
        %1313 = vmatpush1.xpose.msra.mxu0 0.0
        %1314 = vmatprep.subr.mxu0 0.0
        %1315 = vmatpush1.xpose.msra.mxu0 0.0
        %1316 = vmatprep.subr.mxu0 0.0
        %1317 = vmatpush1.xpose.msra.mxu0 0.0
        %1318 = vmatprep.subr.mxu0 0.0
        %1319 = vmatpush1.xpose.msra.mxu0 0.0
        %1320 = vmatprep.subr.mxu0 0.0
        %1321 = vmatpush1.xpose.msra.mxu0 0.0
        %1322 = vmatprep.subr.mxu0 0.0
        %1323 = vmatpush1.xpose.msra.mxu0 0.0
        %1324 = vmatprep.subr.mxu0 0.0
        %1325 = vmatpush1.xpose.msra.mxu0 0.0
        %1326 = vmatprep.subr.mxu0 0.0
        %1327 = vmatpush1.xpose.msra.mxu0 0.0
        %1328 = vmatprep.subr.mxu0 0.0
        %1329 = vmatpush1.xpose.msra.mxu0 0.0
        %1330 = vmatprep.subr.mxu0 0.0
        %1331 = vmatpush1.xpose.msra.mxu0 0.0
        %1332 = vmatprep.subr.mxu0 0.0
        %1333 = vmatpush1.xpose.msra.mxu0 0.0
        %1334 = vmatprep.subr.mxu0 0.0
        %1335 = vmatpush1.xpose.msra.mxu0 0.0
        %1336 = vmatprep.subr.mxu0 0.0
        %1337 = vmatpush1.xpose.msra.mxu0 0.0
        %1338 = vmatprep.subr.mxu0 0.0
        %1339 = vmatpush1.xpose.msra.mxu0 0.0
        %1340 = vmatprep.subr.mxu0 0.0
        %1341 = vmatpush1.xpose.msra.mxu0 0.0
        %1342 = vmatprep.subr.mxu0 0.0
        %1343 = vmatpush1.xpose.msra.mxu0 0.0
        %1344 = vmatprep.subr.mxu0 0.0
        %1345 = vmatpush1.xpose.msra.mxu0 0.0
        %1346 = vmatprep.subr.mxu0 0.0
        %1347 = vmatpush1.xpose.msra.mxu0 0.0
        %1348 = vmatprep.subr.mxu0 0.0
        %1349 = vmatpush1.xpose.msra.mxu0 0.0
        %1350 = vmatprep.mubr.f32.mxu0 0.0
        %1351 = vmatmul.mubr.f32.gmra.mrb[0].mxu0 %v1281
        %v1352 = vpop.f32.mrb[0].mxu0
        %v1353 = vadd.f32 0.0, %v1352
        %v1354 = vpop.f32.mrb[0].mxu0
        %1355 = vdwg.mxu0
        %v1357 = vsel %vm436, %v577, 0
        %v1360 = vsel %vm436, %v857, 0
        %1362 = vmatprep.subr.mxu0 0.0
        %1363 = vmatpush1.xpose.msra.mxu0 %v1360
        %1364 = vmatprep.subr.mxu0 0.0
        %1365 = vmatpush1.xpose.msra.mxu0 0.0
        %1366 = vmatprep.subr.mxu0 0.0
        %1367 = vmatpush1.xpose.msra.mxu0 0.0
        %1368 = vmatprep.subr.mxu0 0.0
        %1369 = vmatpush1.xpose.msra.mxu0 0.0
        %1370 = vmatprep.subr.mxu0 0.0
        %1371 = vmatpush1.xpose.msra.mxu0 0.0
        %1372 = vmatprep.subr.mxu0 0.0
        %1373 = vmatpush1.xpose.msra.mxu0 0.0
        %1374 = vmatprep.subr.mxu0 0.0
        %1375 = vmatpush1.xpose.msra.mxu0 0.0
        %1376 = vmatprep.subr.mxu0 0.0
        %1377 = vmatpush1.xpose.msra.mxu0 0.0
        %1378 = vmatprep.subr.mxu0 0.0
        %1379 = vmatpush1.xpose.msra.mxu0 0.0
        %1380 = vmatprep.subr.mxu0 0.0
        %1381 = vmatpush1.xpose.msra.mxu0 0.0
        %1382 = vmatprep.subr.mxu0 0.0
        %1383 = vmatpush1.xpose.msra.mxu0 0.0
        %1384 = vmatprep.subr.mxu0 0.0
        %1385 = vmatpush1.xpose.msra.mxu0 0.0
        %1386 = vmatprep.subr.mxu0 0.0
        %1387 = vmatpush1.xpose.msra.mxu0 0.0
        %1388 = vmatprep.subr.mxu0 0.0
        %1389 = vmatpush1.xpose.msra.mxu0 0.0
        %1390 = vmatprep.subr.mxu0 0.0
        %1391 = vmatpush1.xpose.msra.mxu0 0.0
        %1392 = vmatprep.subr.mxu0 0.0
        %1393 = vmatpush1.xpose.msra.mxu0 0.0
        %1394 = vmatprep.subr.mxu0 0.0
        %1395 = vmatpush1.xpose.msra.mxu0 0.0
        %1396 = vmatprep.subr.mxu0 0.0
        %1397 = vmatpush1.xpose.msra.mxu0 0.0
        %1398 = vmatprep.subr.mxu0 0.0
        %1399 = vmatpush1.xpose.msra.mxu0 0.0
        %1400 = vmatprep.subr.mxu0 0.0
        %1401 = vmatpush1.xpose.msra.mxu0 0.0
        %1402 = vmatprep.subr.mxu0 0.0
        %1403 = vmatpush1.xpose.msra.mxu0 0.0
        %1404 = vmatprep.subr.mxu0 0.0
        %1405 = vmatpush1.xpose.msra.mxu0 0.0
        %1406 = vmatprep.subr.mxu0 0.0
        %1407 = vmatpush1.xpose.msra.mxu0 0.0
        %1408 = vmatprep.subr.mxu0 0.0
        %1409 = vmatpush1.xpose.msra.mxu0 0.0
        %1410 = vmatprep.subr.mxu0 0.0
        %1411 = vmatpush1.xpose.msra.mxu0 0.0
        %1412 = vmatprep.subr.mxu0 0.0
        %1413 = vmatpush1.xpose.msra.mxu0 0.0
        %1414 = vmatprep.subr.mxu0 0.0
        %1415 = vmatpush1.xpose.msra.mxu0 0.0
        %1416 = vmatprep.subr.mxu0 0.0
        %1417 = vmatpush1.xpose.msra.mxu0 0.0
        %1418 = vmatprep.subr.mxu0 0.0
        %1419 = vmatpush1.xpose.msra.mxu0 0.0
        %1420 = vmatprep.subr.mxu0 0.0
        %1421 = vmatpush1.xpose.msra.mxu0 0.0
        %1422 = vmatprep.subr.mxu0 0.0
        %1423 = vmatpush1.xpose.msra.mxu0 0.0
        %1424 = vmatprep.subr.mxu0 0.0
        %1425 = vmatpush1.xpose.msra.mxu0 0.0
        %1426 = vmatprep.mubr.f32.mxu0 0.0
        %1427 = vmatmul.mubr.f32.gmra.mrb[0].mxu0 %v1357
        %v1428 = vpop.f32.mrb[0].mxu0
        %v1429 = vadd.f32 0.0, %v1428
        %v1430 = vpop.f32.mrb[0].mxu0
        %1431 = vdwg.mxu0
        %v1433 = vsel %vm436, %v647, 0
        %v1436 = vsel %vm436, %v927, 0
        %1438 = vmatprep.subr.mxu0 0.0
        %1439 = vmatpush1.xpose.msra.mxu0 %v1436
        %1440 = vmatprep.subr.mxu0 0.0
        %1441 = vmatpush1.xpose.msra.mxu0 0.0
        %1442 = vmatprep.subr.mxu0 0.0
        %1443 = vmatpush1.xpose.msra.mxu0 0.0
        %1444 = vmatprep.subr.mxu0 0.0
        %1445 = vmatpush1.xpose.msra.mxu0 0.0
        %1446 = vmatprep.subr.mxu0 0.0
        %1447 = vmatpush1.xpose.msra.mxu0 0.0
        %1448 = vmatprep.subr.mxu0 0.0
        %1449 = vmatpush1.xpose.msra.mxu0 0.0
        %1450 = vmatprep.subr.mxu0 0.0
        %1451 = vmatpush1.xpose.msra.mxu0 0.0
        %1452 = vmatprep.subr.mxu0 0.0
        %1453 = vmatpush1.xpose.msra.mxu0 0.0
        %1454 = vmatprep.subr.mxu0 0.0
        %1455 = vmatpush1.xpose.msra.mxu0 0.0
        %1456 = vmatprep.subr.mxu0 0.0
        %1457 = vmatpush1.xpose.msra.mxu0 0.0
        %1458 = vmatprep.subr.mxu0 0.0
        %1459 = vmatpush1.xpose.msra.mxu0 0.0
        %1460 = vmatprep.subr.mxu0 0.0
        %1461 = vmatpush1.xpose.msra.mxu0 0.0
        %1462 = vmatprep.subr.mxu0 0.0
        %1463 = vmatpush1.xpose.msra.mxu0 0.0
        %1464 = vmatprep.subr.mxu0 0.0
        %1465 = vmatpush1.xpose.msra.mxu0 0.0
        %1466 = vmatprep.subr.mxu0 0.0
        %1467 = vmatpush1.xpose.msra.mxu0 0.0
        %1468 = vmatprep.subr.mxu0 0.0
        %1469 = vmatpush1.xpose.msra.mxu0 0.0
        %1470 = vmatprep.subr.mxu0 0.0
        %1471 = vmatpush1.xpose.msra.mxu0 0.0
        %1472 = vmatprep.subr.mxu0 0.0
        %1473 = vmatpush1.xpose.msra.mxu0 0.0
        %1474 = vmatprep.subr.mxu0 0.0
        %1475 = vmatpush1.xpose.msra.mxu0 0.0
        %1476 = vmatprep.subr.mxu0 0.0
        %1477 = vmatpush1.xpose.msra.mxu0 0.0
        %1478 = vmatprep.subr.mxu0 0.0
        %1479 = vmatpush1.xpose.msra.mxu0 0.0
        %1480 = vmatprep.subr.mxu0 0.0
        %1481 = vmatpush1.xpose.msra.mxu0 0.0
        %1482 = vmatprep.subr.mxu0 0.0
        %1483 = vmatpush1.xpose.msra.mxu0 0.0
        %1484 = vmatprep.subr.mxu0 0.0
        %1485 = vmatpush1.xpose.msra.mxu0 0.0
        %1486 = vmatprep.subr.mxu0 0.0
        %1487 = vmatpush1.xpose.msra.mxu0 0.0
        %1488 = vmatprep.subr.mxu0 0.0
        %1489 = vmatpush1.xpose.msra.mxu0 0.0
        %1490 = vmatprep.subr.mxu0 0.0
        %1491 = vmatpush1.xpose.msra.mxu0 0.0
        %1492 = vmatprep.subr.mxu0 0.0
        %1493 = vmatpush1.xpose.msra.mxu0 0.0
        %1494 = vmatprep.subr.mxu0 0.0
        %1495 = vmatpush1.xpose.msra.mxu0 0.0
        %1496 = vmatprep.subr.mxu0 0.0
        %1497 = vmatpush1.xpose.msra.mxu0 0.0
        %1498 = vmatprep.subr.mxu0 0.0
        %1499 = vmatpush1.xpose.msra.mxu0 0.0
        %1500 = vmatprep.subr.mxu0 0.0
        %1501 = vmatpush1.xpose.msra.mxu0 0.0
        %1502 = vmatprep.mubr.f32.mxu0 0.0
        %1503 = vmatmul.mubr.f32.gmra.mrb[0].mxu0 %v1433
        %v1504 = vpop.f32.mrb[0].mxu0
        %v1505 = vadd.f32 0.0, %v1504
        %v1506 = vpop.f32.mrb[0].mxu0
        %1507 = vdwg.mxu0
        %v1509 = vsel %vm436, %v717, 0
        %v1512 = vsel %vm436, %v997, 0
        %1514 = vmatprep.subr.mxu0 0.0
        %1515 = vmatpush1.xpose.msra.mxu0 %v1512
        %1516 = vmatprep.subr.mxu0 0.0
        %1517 = vmatpush1.xpose.msra.mxu0 0.0
        %1518 = vmatprep.subr.mxu0 0.0
        %1519 = vmatpush1.xpose.msra.mxu0 0.0
        %1520 = vmatprep.subr.mxu0 0.0
        %1521 = vmatpush1.xpose.msra.mxu0 0.0
        %1522 = vmatprep.subr.mxu0 0.0
        %1523 = vmatpush1.xpose.msra.mxu0 0.0
        %1524 = vmatprep.subr.mxu0 0.0
        %1525 = vmatpush1.xpose.msra.mxu0 0.0
        %1526 = vmatprep.subr.mxu0 0.0
        %1527 = vmatpush1.xpose.msra.mxu0 0.0
        %1528 = vmatprep.subr.mxu0 0.0
        %1529 = vmatpush1.xpose.msra.mxu0 0.0
        %1530 = vmatprep.subr.mxu0 0.0
        %1531 = vmatpush1.xpose.msra.mxu0 0.0
        %1532 = vmatprep.subr.mxu0 0.0
        %1533 = vmatpush1.xpose.msra.mxu0 0.0
        %1534 = vmatprep.subr.mxu0 0.0
        %1535 = vmatpush1.xpose.msra.mxu0 0.0
        %1536 = vmatprep.subr.mxu0 0.0
        %1537 = vmatpush1.xpose.msra.mxu0 0.0
        %1538 = vmatprep.subr.mxu0 0.0
        %1539 = vmatpush1.xpose.msra.mxu0 0.0
        %1540 = vmatprep.subr.mxu0 0.0
        %1541 = vmatpush1.xpose.msra.mxu0 0.0
        %1542 = vmatprep.subr.mxu0 0.0
        %1543 = vmatpush1.xpose.msra.mxu0 0.0
        %1544 = vmatprep.subr.mxu0 0.0
        %1545 = vmatpush1.xpose.msra.mxu0 0.0
        %1546 = vmatprep.subr.mxu0 0.0
        %1547 = vmatpush1.xpose.msra.mxu0 0.0
        %1548 = vmatprep.subr.mxu0 0.0
        %1549 = vmatpush1.xpose.msra.mxu0 0.0
        %1550 = vmatprep.subr.mxu0 0.0
        %1551 = vmatpush1.xpose.msra.mxu0 0.0
        %1552 = vmatprep.subr.mxu0 0.0
        %1553 = vmatpush1.xpose.msra.mxu0 0.0
        %1554 = vmatprep.subr.mxu0 0.0
        %1555 = vmatpush1.xpose.msra.mxu0 0.0
        %1556 = vmatprep.subr.mxu0 0.0
        %1557 = vmatpush1.xpose.msra.mxu0 0.0
        %1558 = vmatprep.subr.mxu0 0.0
        %1559 = vmatpush1.xpose.msra.mxu0 0.0
        %1560 = vmatprep.subr.mxu0 0.0
        %1561 = vmatpush1.xpose.msra.mxu0 0.0
        %1562 = vmatprep.subr.mxu0 0.0
        %1563 = vmatpush1.xpose.msra.mxu0 0.0
        %1564 = vmatprep.subr.mxu0 0.0
        %1565 = vmatpush1.xpose.msra.mxu0 0.0
        %1566 = vmatprep.subr.mxu0 0.0
        %1567 = vmatpush1.xpose.msra.mxu0 0.0
        %1568 = vmatprep.subr.mxu0 0.0
        %1569 = vmatpush1.xpose.msra.mxu0 0.0
        %1570 = vmatprep.subr.mxu0 0.0
        %1571 = vmatpush1.xpose.msra.mxu0 0.0
        %1572 = vmatprep.subr.mxu0 0.0
        %1573 = vmatpush1.xpose.msra.mxu0 0.0
        %1574 = vmatprep.subr.mxu0 0.0
        %1575 = vmatpush1.xpose.msra.mxu0 0.0
        %1576 = vmatprep.subr.mxu0 0.0
        %1577 = vmatpush1.xpose.msra.mxu0 0.0
        %1578 = vmatprep.mubr.f32.mxu0 0.0
        %1579 = vmatmul.mubr.f32.gmra.mrb[0].mxu0 %v1509
        %v1580 = vpop.f32.mrb[0].mxu0
        %v1581 = vadd.f32 0.0, %v1580
        %v1582 = vpop.f32.mrb[0].mxu0
        %1583 = vdwg.mxu0
        %v1584 = vmul.f32 %v1353, 0.35355338
        %v1585 = vmul.f32 %v1429, 0.35355338
        %v1586 = vmul.f32 %v1505, 0.35355338
        %v1587 = vmul.f32 %v1581, 0.35355338
        %v1588 = vadd.f32 %v1584, %v303
        %v1589 = vadd.f32 %v1585, %v303
        %v1590 = vadd.f32 %v1586, %v303
        %v1591 = vadd.f32 %v1587, %v303
        %vm1592 = vcmask 64512
        %v1593 = vsel %vm1592, %v1588, -inf
        %1594 = vmax.xlane.f32.xlu0 %v1593
        %v1595 = vpop.xlane.xlu0 %1594
        %v1596 = vsel %vm1592, %v1589, -inf
        %1597 = vmax.xlane.f32.xlu0 %v1596
        %v1598 = vpop.xlane.xlu0 %1597
        %v1599 = vsel %vm1592, %v1590, -inf
        %1600 = vmax.xlane.f32.xlu0 %v1599
        %v1601 = vpop.xlane.xlu0 %1600
        %v1602 = vsel %vm1592, %v1591, -inf
        %1603 = vmax.xlane.f32.xlu0 %v1602
        %v1604 = vpop.xlane.xlu0 %1603
        %v1605 = vsub.f32 %v1588, %v1595
        %v1606 = vsub.f32 %v1589, %v1598
        %v1607 = vsub.f32 %v1590, %v1601
        %v1608 = vsub.f32 %v1591, %v1604
        %v1609 = vmul.f32 %v1605, 1.442695
        %v1610 = vpow.pop %v1609
        %v1611 = vmul.f32 %v1606, 1.442695
        %v1612 = vpow.pop %v1611
        %v1613 = vmul.f32 %v1607, 1.442695
        %v1614 = vpow.pop %v1613
        %v1615 = vmul.f32 %v1608, 1.442695
        %v1616 = vpow.pop %v1615
        %v1617 = vsel %vm1592, %v1610, 0.0
        %1618 = vadd.xlane.f32.xlu0 %v1617
        %v1619 = vpop.xlane.xlu0 %1618
        %v1620 = vsel %vm1592, %v1612, 0.0
        %1621 = vadd.xlane.f32.xlu0 %v1620
        %v1622 = vpop.xlane.xlu0 %1621
        %v1623 = vsel %vm1592, %v1614, 0.0
        %1624 = vadd.xlane.f32.xlu0 %v1623
        %v1625 = vpop.xlane.xlu0 %1624
        %v1626 = vsel %vm1592, %v1616, 0.0
        %1627 = vadd.xlane.f32.xlu0 %v1626
        %v1628 = vpop.xlane.xlu0 %1627
        %v1629 = vrcp.pop %v1619
        %v1630 = vmul.f32 %v1610, %v1629
        %v1631 = vrcp.pop %v1622
        %v1632 = vmul.f32 %v1612, %v1631
        %v1633 = vrcp.pop %v1625
        %v1634 = vmul.f32 %v1614, %v1633
        %v1635 = vrcp.pop %v1628
        %v1636 = vmul.f32 %v1616, %v1635
        %1637 = vst.msk [vmem:[%s293] sm:$0xff] %vm1592, %v1630
        %1638 = vst.msk [vmem:[%s293 + $0x8] sm:$0xff] %vm1592, %v1632
        %1639 = vst.msk [vmem:[%s293 + $0x10] sm:$0xff] %vm1592, %v1634
        %1640 = vst.msk [vmem:[%s293 + $0x18] sm:$0xff] %vm1592, %v1636
        %v1641 = vld [vmem:[%s5] sm:$0x7f]
        %v1643 = vsel %vm1592, %v1630, 0
        %1645 = vmatprep.subr.mxu0 0.0
        %1646 = vmatpush1.msra.mxu0 %v1067
        %1647 = vmatprep.subr.mxu0 0.0
        %1648 = vmatpush1.msra.mxu0 0.0
        %1649 = vmatprep.subr.mxu0 0.0
        %1650 = vmatpush1.msra.mxu0 0.0
        %1651 = vmatprep.subr.mxu0 0.0
        %1652 = vmatpush1.msra.mxu0 0.0
        %1653 = vmatprep.subr.mxu0 0.0
        %1654 = vmatpush1.msra.mxu0 0.0
        %1655 = vmatprep.subr.mxu0 0.0
        %1656 = vmatpush1.msra.mxu0 0.0
        %1657 = vmatprep.subr.mxu0 0.0
        %1658 = vmatpush1.msra.mxu0 0.0
        %1659 = vmatprep.subr.mxu0 0.0
        %1660 = vmatpush1.msra.mxu0 0.0
        %1661 = vmatprep.subr.mxu0 0.0
        %1662 = vmatpush1.msra.mxu0 0.0
        %1663 = vmatprep.subr.mxu0 0.0
        %1664 = vmatpush1.msra.mxu0 0.0
        %1665 = vmatprep.subr.mxu0 0.0
        %1666 = vmatpush1.msra.mxu0 0.0
        %1667 = vmatprep.subr.mxu0 0.0
        %1668 = vmatpush1.msra.mxu0 0.0
        %1669 = vmatprep.subr.mxu0 0.0
        %1670 = vmatpush1.msra.mxu0 0.0
        %1671 = vmatprep.subr.mxu0 0.0
        %1672 = vmatpush1.msra.mxu0 0.0
        %1673 = vmatprep.subr.mxu0 0.0
        %1674 = vmatpush1.msra.mxu0 0.0
        %1675 = vmatprep.subr.mxu0 0.0
        %1676 = vmatpush1.msra.mxu0 0.0
        %1677 = vmatprep.subr.mxu0 0.0
        %1678 = vmatpush1.msra.mxu0 0.0
        %1679 = vmatprep.subr.mxu0 0.0
        %1680 = vmatpush1.msra.mxu0 0.0
        %1681 = vmatprep.subr.mxu0 0.0
        %1682 = vmatpush1.msra.mxu0 0.0
        %1683 = vmatprep.subr.mxu0 0.0
        %1684 = vmatpush1.msra.mxu0 0.0
        %1685 = vmatprep.subr.mxu0 0.0
        %1686 = vmatpush1.msra.mxu0 0.0
        %1687 = vmatprep.subr.mxu0 0.0
        %1688 = vmatpush1.msra.mxu0 0.0
        %1689 = vmatprep.subr.mxu0 0.0
        %1690 = vmatpush1.msra.mxu0 0.0
        %1691 = vmatprep.subr.mxu0 0.0
        %1692 = vmatpush1.msra.mxu0 0.0
        %1693 = vmatprep.subr.mxu0 0.0
        %1694 = vmatpush1.msra.mxu0 0.0
        %1695 = vmatprep.subr.mxu0 0.0
        %1696 = vmatpush1.msra.mxu0 0.0
        %1697 = vmatprep.subr.mxu0 0.0
        %1698 = vmatpush1.msra.mxu0 0.0
        %1699 = vmatprep.subr.mxu0 0.0
        %1700 = vmatpush1.msra.mxu0 0.0
        %1701 = vmatprep.subr.mxu0 0.0
        %1702 = vmatpush1.msra.mxu0 0.0
        %1703 = vmatprep.subr.mxu0 0.0
        %1704 = vmatpush1.msra.mxu0 0.0
        %1705 = vmatprep.subr.mxu0 0.0
        %1706 = vmatpush1.msra.mxu0 0.0
        %1707 = vmatprep.subr.mxu0 0.0
        %1708 = vmatpush1.msra.mxu0 0.0
        %1709 = vmatprep.mubr.f32.mxu0 0.0
        %1710 = vmatmul.mubr.f32.gmra.mrb[0].mxu0 %v1643
        %v1711 = vpop.f32.mrb[0].mxu0
        %v1712 = vadd.f32 0.0, %v1711
        %v1713 = vpop.f32.mrb[0].mxu0
        %1714 = vdwg.mxu0
        %v1716 = vsel %vm1592, %v1632, 0
        %1718 = vmatprep.subr.mxu0 0.0
        %1719 = vmatpush1.msra.mxu0 %v1137
        %1720 = vmatprep.subr.mxu0 0.0
        %1721 = vmatpush1.msra.mxu0 0.0
        %1722 = vmatprep.subr.mxu0 0.0
        %1723 = vmatpush1.msra.mxu0 0.0
        %1724 = vmatprep.subr.mxu0 0.0
        %1725 = vmatpush1.msra.mxu0 0.0
        %1726 = vmatprep.subr.mxu0 0.0
        %1727 = vmatpush1.msra.mxu0 0.0
        %1728 = vmatprep.subr.mxu0 0.0
        %1729 = vmatpush1.msra.mxu0 0.0
        %1730 = vmatprep.subr.mxu0 0.0
        %1731 = vmatpush1.msra.mxu0 0.0
        %1732 = vmatprep.subr.mxu0 0.0
        %1733 = vmatpush1.msra.mxu0 0.0
        %1734 = vmatprep.subr.mxu0 0.0
        %1735 = vmatpush1.msra.mxu0 0.0
        %1736 = vmatprep.subr.mxu0 0.0
        %1737 = vmatpush1.msra.mxu0 0.0
        %1738 = vmatprep.subr.mxu0 0.0
        %1739 = vmatpush1.msra.mxu0 0.0
        %1740 = vmatprep.subr.mxu0 0.0
        %1741 = vmatpush1.msra.mxu0 0.0
        %1742 = vmatprep.subr.mxu0 0.0
        %1743 = vmatpush1.msra.mxu0 0.0
        %1744 = vmatprep.subr.mxu0 0.0
        %1745 = vmatpush1.msra.mxu0 0.0
        %1746 = vmatprep.subr.mxu0 0.0
        %1747 = vmatpush1.msra.mxu0 0.0
        %1748 = vmatprep.subr.mxu0 0.0
        %1749 = vmatpush1.msra.mxu0 0.0
        %1750 = vmatprep.subr.mxu0 0.0
        %1751 = vmatpush1.msra.mxu0 0.0
        %1752 = vmatprep.subr.mxu0 0.0
        %1753 = vmatpush1.msra.mxu0 0.0
        %1754 = vmatprep.subr.mxu0 0.0
        %1755 = vmatpush1.msra.mxu0 0.0
        %1756 = vmatprep.subr.mxu0 0.0
        %1757 = vmatpush1.msra.mxu0 0.0
        %1758 = vmatprep.subr.mxu0 0.0
        %1759 = vmatpush1.msra.mxu0 0.0
        %1760 = vmatprep.subr.mxu0 0.0
        %1761 = vmatpush1.msra.mxu0 0.0
        %1762 = vmatprep.subr.mxu0 0.0
        %1763 = vmatpush1.msra.mxu0 0.0
        %1764 = vmatprep.subr.mxu0 0.0
        %1765 = vmatpush1.msra.mxu0 0.0
        %1766 = vmatprep.subr.mxu0 0.0
        %1767 = vmatpush1.msra.mxu0 0.0
        %1768 = vmatprep.subr.mxu0 0.0
        %1769 = vmatpush1.msra.mxu0 0.0
        %1770 = vmatprep.subr.mxu0 0.0
        %1771 = vmatpush1.msra.mxu0 0.0
        %1772 = vmatprep.subr.mxu0 0.0
        %1773 = vmatpush1.msra.mxu0 0.0
        %1774 = vmatprep.subr.mxu0 0.0
        %1775 = vmatpush1.msra.mxu0 0.0
        %1776 = vmatprep.subr.mxu0 0.0
        %1777 = vmatpush1.msra.mxu0 0.0
        %1778 = vmatprep.subr.mxu0 0.0
        %1779 = vmatpush1.msra.mxu0 0.0
        %1780 = vmatprep.subr.mxu0 0.0
        %1781 = vmatpush1.msra.mxu0 0.0
        %1782 = vmatprep.mubr.f32.mxu0 0.0
        %1783 = vmatmul.mubr.f32.gmra.mrb[0].mxu0 %v1716
        %v1784 = vpop.f32.mrb[0].mxu0
        %v1785 = vadd.f32 0.0, %v1784
        %v1786 = vpop.f32.mrb[0].mxu0
        %1787 = vdwg.mxu0
        %v1789 = vsel %vm1592, %v1634, 0
        %1791 = vmatprep.subr.mxu0 0.0
        %1792 = vmatpush1.msra.mxu0 %v1207
        %1793 = vmatprep.subr.mxu0 0.0
        %1794 = vmatpush1.msra.mxu0 0.0
        %1795 = vmatprep.subr.mxu0 0.0
        %1796 = vmatpush1.msra.mxu0 0.0
        %1797 = vmatprep.subr.mxu0 0.0
        %1798 = vmatpush1.msra.mxu0 0.0
        %1799 = vmatprep.subr.mxu0 0.0
        %1800 = vmatpush1.msra.mxu0 0.0
        %1801 = vmatprep.subr.mxu0 0.0
        %1802 = vmatpush1.msra.mxu0 0.0
        %1803 = vmatprep.subr.mxu0 0.0
        %1804 = vmatpush1.msra.mxu0 0.0
        %1805 = vmatprep.subr.mxu0 0.0
        %1806 = vmatpush1.msra.mxu0 0.0
        %1807 = vmatprep.subr.mxu0 0.0
        %1808 = vmatpush1.msra.mxu0 0.0
        %1809 = vmatprep.subr.mxu0 0.0
        %1810 = vmatpush1.msra.mxu0 0.0
        %1811 = vmatprep.subr.mxu0 0.0
        %1812 = vmatpush1.msra.mxu0 0.0
        %1813 = vmatprep.subr.mxu0 0.0
        %1814 = vmatpush1.msra.mxu0 0.0
        %1815 = vmatprep.subr.mxu0 0.0
        %1816 = vmatpush1.msra.mxu0 0.0
        %1817 = vmatprep.subr.mxu0 0.0
        %1818 = vmatpush1.msra.mxu0 0.0
        %1819 = vmatprep.subr.mxu0 0.0
        %1820 = vmatpush1.msra.mxu0 0.0
        %1821 = vmatprep.subr.mxu0 0.0
        %1822 = vmatpush1.msra.mxu0 0.0
        %1823 = vmatprep.subr.mxu0 0.0
        %1824 = vmatpush1.msra.mxu0 0.0
        %1825 = vmatprep.subr.mxu0 0.0
        %1826 = vmatpush1.msra.mxu0 0.0
        %1827 = vmatprep.subr.mxu0 0.0
        %1828 = vmatpush1.msra.mxu0 0.0
        %1829 = vmatprep.subr.mxu0 0.0
        %1830 = vmatpush1.msra.mxu0 0.0
        %1831 = vmatprep.subr.mxu0 0.0
        %1832 = vmatpush1.msra.mxu0 0.0
        %1833 = vmatprep.subr.mxu0 0.0
        %1834 = vmatpush1.msra.mxu0 0.0
        %1835 = vmatprep.subr.mxu0 0.0
        %1836 = vmatpush1.msra.mxu0 0.0
        %1837 = vmatprep.subr.mxu0 0.0
        %1838 = vmatpush1.msra.mxu0 0.0
        %1839 = vmatprep.subr.mxu0 0.0
        %1840 = vmatpush1.msra.mxu0 0.0
        %1841 = vmatprep.subr.mxu0 0.0
        %1842 = vmatpush1.msra.mxu0 0.0
        %1843 = vmatprep.subr.mxu0 0.0
        %1844 = vmatpush1.msra.mxu0 0.0
        %1845 = vmatprep.subr.mxu0 0.0
        %1846 = vmatpush1.msra.mxu0 0.0
        %1847 = vmatprep.subr.mxu0 0.0
        %1848 = vmatpush1.msra.mxu0 0.0
        %1849 = vmatprep.subr.mxu0 0.0
        %1850 = vmatpush1.msra.mxu0 0.0
        %1851 = vmatprep.subr.mxu0 0.0
        %1852 = vmatpush1.msra.mxu0 0.0
        %1853 = vmatprep.subr.mxu0 0.0
        %1854 = vmatpush1.msra.mxu0 0.0
        %1855 = vmatprep.mubr.f32.mxu0 0.0
        %1856 = vmatmul.mubr.f32.gmra.mrb[0].mxu0 %v1789
        %v1857 = vpop.f32.mrb[0].mxu0
        %v1858 = vadd.f32 0.0, %v1857
        %v1859 = vpop.f32.mrb[0].mxu0
        %1860 = vdwg.mxu0
        %v1862 = vsel %vm1592, %v1636, 0
        %1864 = vmatprep.subr.mxu0 0.0
        %1865 = vmatpush1.msra.mxu0 %v1277
        %1866 = vmatprep.subr.mxu0 0.0
        %1867 = vmatpush1.msra.mxu0 0.0
        %1868 = vmatprep.subr.mxu0 0.0
        %1869 = vmatpush1.msra.mxu0 0.0
        %1870 = vmatprep.subr.mxu0 0.0
        %1871 = vmatpush1.msra.mxu0 0.0
        %1872 = vmatprep.subr.mxu0 0.0
        %1873 = vmatpush1.msra.mxu0 0.0
        %1874 = vmatprep.subr.mxu0 0.0
        %1875 = vmatpush1.msra.mxu0 0.0
        %1876 = vmatprep.subr.mxu0 0.0
        %1877 = vmatpush1.msra.mxu0 0.0
        %1878 = vmatprep.subr.mxu0 0.0
        %1879 = vmatpush1.msra.mxu0 0.0
        %1880 = vmatprep.subr.mxu0 0.0
        %1881 = vmatpush1.msra.mxu0 0.0
        %1882 = vmatprep.subr.mxu0 0.0
        %1883 = vmatpush1.msra.mxu0 0.0
        %1884 = vmatprep.subr.mxu0 0.0
        %1885 = vmatpush1.msra.mxu0 0.0
        %1886 = vmatprep.subr.mxu0 0.0
        %1887 = vmatpush1.msra.mxu0 0.0
        %1888 = vmatprep.subr.mxu0 0.0
        %1889 = vmatpush1.msra.mxu0 0.0
        %1890 = vmatprep.subr.mxu0 0.0
        %1891 = vmatpush1.msra.mxu0 0.0
        %1892 = vmatprep.subr.mxu0 0.0
        %1893 = vmatpush1.msra.mxu0 0.0
        %1894 = vmatprep.subr.mxu0 0.0
        %1895 = vmatpush1.msra.mxu0 0.0
        %1896 = vmatprep.subr.mxu0 0.0
        %1897 = vmatpush1.msra.mxu0 0.0
        %1898 = vmatprep.subr.mxu0 0.0
        %1899 = vmatpush1.msra.mxu0 0.0
        %1900 = vmatprep.subr.mxu0 0.0
        %1901 = vmatpush1.msra.mxu0 0.0
        %1902 = vmatprep.subr.mxu0 0.0
        %1903 = vmatpush1.msra.mxu0 0.0
        %1904 = vmatprep.subr.mxu0 0.0
        %1905 = vmatpush1.msra.mxu0 0.0
        %1906 = vmatprep.subr.mxu0 0.0
        %1907 = vmatpush1.msra.mxu0 0.0
        %1908 = vmatprep.subr.mxu0 0.0
        %1909 = vmatpush1.msra.mxu0 0.0
        %1910 = vmatprep.subr.mxu0 0.0
        %1911 = vmatpush1.msra.mxu0 0.0
        %1912 = vmatprep.subr.mxu0 0.0
        %1913 = vmatpush1.msra.mxu0 0.0
        %1914 = vmatprep.subr.mxu0 0.0
        %1915 = vmatpush1.msra.mxu0 0.0
        %1916 = vmatprep.subr.mxu0 0.0
        %1917 = vmatpush1.msra.mxu0 0.0
        %1918 = vmatprep.subr.mxu0 0.0
        %1919 = vmatpush1.msra.mxu0 0.0
        %1920 = vmatprep.subr.mxu0 0.0
        %1921 = vmatpush1.msra.mxu0 0.0
        %1922 = vmatprep.subr.mxu0 0.0
        %1923 = vmatpush1.msra.mxu0 0.0
        %1924 = vmatprep.subr.mxu0 0.0
        %1925 = vmatpush1.msra.mxu0 0.0
        %1926 = vmatprep.subr.mxu0 0.0
        %1927 = vmatpush1.msra.mxu0 0.0
        %1928 = vmatprep.mubr.f32.mxu0 0.0
        %1929 = vmatmul.mubr.f32.gmra.mrb[0].mxu0 %v1862
        %v1930 = vpop.f32.mrb[0].mxu0
        %v1931 = vadd.f32 0.0, %v1930
        %v1932 = vpop.f32.mrb[0].mxu0
        %1933 = vdwg.mxu0
        %v1934 = vsel %vm436, %v1712, 0.0
        %v1935 = vsel %vm436, %v1785, 0.0
        %v1936 = vadd.f32 %v1934, %v1935
        %v1937 = vsel %vm436, %v1858, 0.0
        %v1938 = vadd.f32 %v1936, %v1937
        %v1939 = vsel %vm436, %v1931, 0.0
        %v1940 = vadd.f32 %v1938, %v1939
        %v1941 = vlaneseq
        %v1942 = vshrl.u32 %v1941, 7
        %v1943 = vsub.s32 0, %v1942
        %v1944 = vrot.slane %v1641, %v1943
        %v1945 = vadd.f32 %v1940, %v1944
        %v1946 = vadd.f32 %v1945, %v302
        %v1947 = vsel %vm436, %v1946, 0.0
        %1948 = vadd.xlane.f32.xlu0 %v1947
        %v1949 = vpop.xlane.xlu0 %1948
        %v1950 = vrcp.pop 32.0
        %v1951 = vmul.f32 %v1949, %v1950
        %v1952 = vsub.f32 %v1946, %v1951
        %v1953 = vmul.f32 %v1952, %v1952
        %v1954 = vsel %vm436, %v1953, 0.0
        %1955 = vadd.xlane.f32.xlu0 %v1954
        %v1956 = vpop.xlane.xlu0 %1955
        %v1957 = vmul.f32 %v1956, %v1950
        %v1958 = vadd.f32 %v1957, 1e-05
        %v1959 = vrsqrt.pop %v1958
        %v1960 = vmul.f32 %v1952, %v1959
        %v1961 = vlaneseq
        %v1962 = vshrl.u32 %v1961, 7
        %v1963 = vsub.s32 1, %v1962
        %v1964 = vrot.slane %v1641, %v1963
        %v1965 = vmul.f32 %v1960, %v1964
        %v1966 = vlaneseq
        %v1967 = vshrl.u32 %v1966, 7
        %v1968 = vsub.s32 2, %v1967
        %v1969 = vrot.slane %v1641, %v1968
        %v1970 = vadd.f32 %v1965, %v1969
        %v1971 = vld [vmem:[%s4] sm:$0xff]
        %v1972 = vld [vmem:[%s4 + $0x8] sm:$0xff]
        %v1973 = vld [vmem:[%s4 + $0x10] sm:$0xff]
        %v1974 = vld [vmem:[%s4 + $0x18] sm:$0xff]
        %v1975 = vld [vmem:[%s4 + $0x20] sm:$0xff]
        %v1976 = vld [vmem:[%s4 + $0x28] sm:$0xff]
        %v1977 = vld [vmem:[%s4 + $0x30] sm:$0xff]
        %v1978 = vld [vmem:[%s4 + $0x38] sm:$0xff]
        %v1979 = vld [vmem:[%s4 + $0x40] sm:$0xff]
        %v1980 = vld [vmem:[%s4 + $0x48] sm:$0xff]
        %v1981 = vld [vmem:[%s4 + $0x50] sm:$0xff]
        %v1982 = vld [vmem:[%s4 + $0x58] sm:$0xff]
        %v1983 = vlaneseq
        %v1984 = vshrl.u32 %v1983, 7
        %v1985 = vsub.s32 3, %v1984
        %v1986 = vrot.slane %v1641, %v1985
        %v1988 = vsel %vm436, %v1970, 0
        %1990 = vmatprep.subr.mxu0 0.0
        %1991 = vmatpush1.msra.mxu0 %v1971
        %1992 = vmatprep.subr.mxu0 0.0
        %1993 = vmatpush1.msra.mxu0 %v1972
        %1994 = vmatprep.subr.mxu0 0.0
        %1995 = vmatpush1.msra.mxu0 %v1973
        %1996 = vmatprep.subr.mxu0 0.0
        %1997 = vmatpush1.msra.mxu0 %v1974
        %1998 = vmatprep.subr.mxu0 0.0
        %1999 = vmatpush1.msra.mxu0 0.0
        %2000 = vmatprep.subr.mxu0 0.0
        %2001 = vmatpush1.msra.mxu0 0.0
        %2002 = vmatprep.subr.mxu0 0.0
        %2003 = vmatpush1.msra.mxu0 0.0
        %2004 = vmatprep.subr.mxu0 0.0
        %2005 = vmatpush1.msra.mxu0 0.0
        %2006 = vmatprep.subr.mxu0 0.0
        %2007 = vmatpush1.msra.mxu0 0.0
        %2008 = vmatprep.subr.mxu0 0.0
        %2009 = vmatpush1.msra.mxu0 0.0
        %2010 = vmatprep.subr.mxu0 0.0
        %2011 = vmatpush1.msra.mxu0 0.0
        %2012 = vmatprep.subr.mxu0 0.0
        %2013 = vmatpush1.msra.mxu0 0.0
        %2014 = vmatprep.subr.mxu0 0.0
        %2015 = vmatpush1.msra.mxu0 0.0
        %2016 = vmatprep.subr.mxu0 0.0
        %2017 = vmatpush1.msra.mxu0 0.0
        %2018 = vmatprep.subr.mxu0 0.0
        %2019 = vmatpush1.msra.mxu0 0.0
        %2020 = vmatprep.subr.mxu0 0.0
        %2021 = vmatpush1.msra.mxu0 0.0
        %2022 = vmatprep.subr.mxu0 0.0
        %2023 = vmatpush1.msra.mxu0 0.0
        %2024 = vmatprep.subr.mxu0 0.0
        %2025 = vmatpush1.msra.mxu0 0.0
        %2026 = vmatprep.subr.mxu0 0.0
        %2027 = vmatpush1.msra.mxu0 0.0
        %2028 = vmatprep.subr.mxu0 0.0
        %2029 = vmatpush1.msra.mxu0 0.0
        %2030 = vmatprep.subr.mxu0 0.0
        %2031 = vmatpush1.msra.mxu0 0.0
        %2032 = vmatprep.subr.mxu0 0.0
        %2033 = vmatpush1.msra.mxu0 0.0
        %2034 = vmatprep.subr.mxu0 0.0
        %2035 = vmatpush1.msra.mxu0 0.0
        %2036 = vmatprep.subr.mxu0 0.0
        %2037 = vmatpush1.msra.mxu0 0.0
        %2038 = vmatprep.subr.mxu0 0.0
        %2039 = vmatpush1.msra.mxu0 0.0
        %2040 = vmatprep.subr.mxu0 0.0
        %2041 = vmatpush1.msra.mxu0 0.0
        %2042 = vmatprep.subr.mxu0 0.0
        %2043 = vmatpush1.msra.mxu0 0.0
        %2044 = vmatprep.subr.mxu0 0.0
        %2045 = vmatpush1.msra.mxu0 0.0
        %2046 = vmatprep.subr.mxu0 0.0
        %2047 = vmatpush1.msra.mxu0 0.0
        %2048 = vmatprep.subr.mxu0 0.0
        %2049 = vmatpush1.msra.mxu0 0.0
        %2050 = vmatprep.subr.mxu0 0.0
        %2051 = vmatpush1.msra.mxu0 0.0
        %2052 = vmatprep.subr.mxu0 0.0
        %2053 = vmatpush1.msra.mxu0 0.0
        %2054 = vmatprep.mubr.f32.mxu0 0.0
        %2055 = vmatmul.mubr.f32.gmra.mrb[0].mxu0 %v1988
        %v2056 = vpop.f32.mrb[0].mxu0
        %v2057 = vadd.f32 %v1986, %v2056
        %v2058 = vpop.f32.mrb[0].mxu0
        %2059 = vdwg.mxu0
        %v2060 = vmax.f32 %v2057, 0.0
        %v2061 = vlaneseq
        %v2062 = vshrl.u32 %v2061, 7
        %v2063 = vsub.s32 4, %v2062
        %v2064 = vrot.slane %v1641, %v2063
        %vm2065 = vcmask 523264
        %v2067 = vsel %vm2065, %v2060, 0
        %2069 = vmatprep.subr.mxu0 0.0
        %2070 = vmatpush1.msra.mxu0 %v1975
        %2071 = vmatprep.subr.mxu0 0.0
        %2072 = vmatpush1.msra.mxu0 %v1976
        %2073 = vmatprep.subr.mxu0 0.0
        %2074 = vmatpush1.msra.mxu0 %v1977
        %2075 = vmatprep.subr.mxu0 0.0
        %2076 = vmatpush1.msra.mxu0 %v1978
        %2077 = vmatprep.subr.mxu0 0.0
        %2078 = vmatpush1.msra.mxu0 %v1979
        %2079 = vmatprep.subr.mxu0 0.0
        %2080 = vmatpush1.msra.mxu0 %v1980
        %2081 = vmatprep.subr.mxu0 0.0
        %2082 = vmatpush1.msra.mxu0 %v1981
        %2083 = vmatprep.subr.mxu0 0.0
        %2084 = vmatpush1.msra.mxu0 %v1982
        %2085 = vmatprep.subr.mxu0 0.0
        %2086 = vmatpush1.msra.mxu0 0.0
        %2087 = vmatprep.subr.mxu0 0.0
        %2088 = vmatpush1.msra.mxu0 0.0
        %2089 = vmatprep.subr.mxu0 0.0
        %2090 = vmatpush1.msra.mxu0 0.0
        %2091 = vmatprep.subr.mxu0 0.0
        %2092 = vmatpush1.msra.mxu0 0.0
        %2093 = vmatprep.subr.mxu0 0.0
        %2094 = vmatpush1.msra.mxu0 0.0
        %2095 = vmatprep.subr.mxu0 0.0
        %2096 = vmatpush1.msra.mxu0 0.0
        %2097 = vmatprep.subr.mxu0 0.0
        %2098 = vmatpush1.msra.mxu0 0.0
        %2099 = vmatprep.subr.mxu0 0.0
        %2100 = vmatpush1.msra.mxu0 0.0
        %2101 = vmatprep.subr.mxu0 0.0
        %2102 = vmatpush1.msra.mxu0 0.0
        %2103 = vmatprep.subr.mxu0 0.0
        %2104 = vmatpush1.msra.mxu0 0.0
        %2105 = vmatprep.subr.mxu0 0.0
        %2106 = vmatpush1.msra.mxu0 0.0
        %2107 = vmatprep.subr.mxu0 0.0
        %2108 = vmatpush1.msra.mxu0 0.0
        %2109 = vmatprep.subr.mxu0 0.0
        %2110 = vmatpush1.msra.mxu0 0.0
        %2111 = vmatprep.subr.mxu0 0.0
        %2112 = vmatpush1.msra.mxu0 0.0
        %2113 = vmatprep.subr.mxu0 0.0
        %2114 = vmatpush1.msra.mxu0 0.0
        %2115 = vmatprep.subr.mxu0 0.0
        %2116 = vmatpush1.msra.mxu0 0.0
        %2117 = vmatprep.subr.mxu0 0.0
        %2118 = vmatpush1.msra.mxu0 0.0
        %2119 = vmatprep.subr.mxu0 0.0
        %2120 = vmatpush1.msra.mxu0 0.0
        %2121 = vmatprep.subr.mxu0 0.0
        %2122 = vmatpush1.msra.mxu0 0.0
        %2123 = vmatprep.subr.mxu0 0.0
        %2124 = vmatpush1.msra.mxu0 0.0
        %2125 = vmatprep.subr.mxu0 0.0
        %2126 = vmatpush1.msra.mxu0 0.0
        %2127 = vmatprep.subr.mxu0 0.0
        %2128 = vmatpush1.msra.mxu0 0.0
        %2129 = vmatprep.subr.mxu0 0.0
        %2130 = vmatpush1.msra.mxu0 0.0
        %2131 = vmatprep.subr.mxu0 0.0
        %2132 = vmatpush1.msra.mxu0 0.0
        %2133 = vmatprep.mubr.f32.mxu0 0.0
        %2134 = vmatmul.mubr.f32.gmra.mrb[0].mxu0 %v2067
        %v2135 = vpop.f32.mrb[0].mxu0
        %v2136 = vadd.f32 %v2064, %v2135
        %v2137 = vpop.f32.mrb[0].mxu0
        %2138 = vdwg.mxu0
        %v2139 = vadd.f32 %v2136, %v1970
        %v2140 = vsel %vm436, %v2139, 0.0
        %2141 = vadd.xlane.f32.xlu0 %v2140
        %v2142 = vpop.xlane.xlu0 %2141
        %v2143 = vmul.f32 %v2142, %v1950
        %v2144 = vsub.f32 %v2139, %v2143
        %v2145 = vmul.f32 %v2144, %v2144
        %v2146 = vsel %vm436, %v2145, 0.0
        %2147 = vadd.xlane.f32.xlu0 %v2146
        %v2148 = vpop.xlane.xlu0 %2147
        %v2149 = vmul.f32 %v2148, %v1950
        %v2150 = vadd.f32 %v2149, 1e-05
        %v2151 = vrsqrt.pop %v2150
        %v2152 = vmul.f32 %v2144, %v2151
        %v2153 = vlaneseq
        %v2154 = vshrl.u32 %v2153, 7
        %v2155 = vsub.s32 5, %v2154
        %v2156 = vrot.slane %v1641, %v2155
        %v2157 = vmul.f32 %v2152, %v2156
        %v2158 = vlaneseq
        %v2159 = vshrl.u32 %v2158, 7
        %v2160 = vsub.s32 6, %v2159
        %v2161 = vrot.slane %v1641, %v2160
        %v2162 = vadd.f32 %v2157, %v2161
        %2163 = vst.msk [vmem:[%s286] sm:$0xff] %vm436, %v2162
        %s2164 = sand.u32 %s169, 1
        %s2165 = scalar_lea.sflag [#allocation3], %s2164
        %s2166 = sand.u32 %s169, 1
        %s2167 = smul.addr %s2166, 8
        %s2168 = scalar_lea.vmem [#allocation2], %s2167
        %s2169 = sand.u32 %s195, 1
        %s2170 = scalar_lea.sflag [#allocation5], %s2169
        %s2171 = sand.u32 %s195, 1
        %s2172 = smul.addr %s2171, 32
        %s2173 = scalar_lea.vmem [#allocation4], %s2172
        // Predicated region
        $region45: #{encoder_layer.1} parent=43 // pred_check
          %p2174 = pneg %p179
        $region46: #{encoder_layer.1} parent=43 // pred_check_branch
          %2176 = sbr.rel (%p2174) target = $region48
        $region47: #{encoder_layer.1} parent=43 // pred_region
          %s2178 = ssub.s32 128, 128
          %2179 = vsyncadd %s2165, %s2178
          %s2180 = smul.addr %s25, 128
          %s2181 = scalar_lea.hbm %s6, %s2180
          %s2183 = sshll.u32 %s2168, 4
          %s2184 = int_to_ptr.vmem [resolvable:$true] %s2183
          %2186 = dma.vmem_to_hbm [thread:$0]  %s2184, 128, %s2181, %s2165
        $region48: #{encoder_layer.1} parent=43 // pred_fallthru
          _
        // Predicated region
        $region49: #{encoder_layer.1} parent=43 // pred_check
          %p2187 = pneg %p205
        $region50: #{encoder_layer.1} parent=43 // pred_check_branch
          %2189 = sbr.rel (%p2187) target = $region52
        $region51: #{encoder_layer.1} parent=43 // pred_region
          %s2191 = ssub.s32 512, 512
          %2192 = vsyncadd %s2170, %s2191
          %s2193 = smul.addr %s25, 4
          %s2194 = smul.addr %s2193, 128
          %s2195 = scalar_lea.hbm %s7, %s2194
          %s2196 = sshll.u32 %s2173, 4
          %s2197 = int_to_ptr.vmem [resolvable:$true] %s2196
          %2202 = dma.vmem_to_hbm [thread:$0]  %s2197, 512, %s2195, %s2170, 128, 128, 8
        $region52: #{encoder_layer.1} parent=43 // pred_fallthru
          _
      $region44: #{encoder_layer.1} parent=5 // pred_fallthru
        _
      %p2203 = scmp.le.s32.totalorder 2, %s20
      // Predicated region
      $region53: #{encoder_layer.1} parent=5 // pred_check
        %p2204 = pneg %p2203
      $region54: #{encoder_layer.1} parent=5 // pred_check_branch
        %2206 = sbr.rel (%p2204) target = $region56
      $region55: #{encoder_layer.1} parent=5 // pred_region
        %s2207 = ssub.s32 %s20, 2
        // Predicated region
        $region57: #{encoder_layer.1} parent=55 // pred_check
          %p2208 = pneg %p185
        $region58: #{encoder_layer.1} parent=55 // pred_check_branch
          %2210 = sbr.rel (%p2208) target = $region60
        $region59: #{encoder_layer.1} parent=55 // pred_region
          %s2211 = sand.u32 %s170, 1
          %s2212 = scalar_lea.sflag [#allocation3], %s2211
          %s2213 = sand.u32 %s170, 1
          %s2214 = smul.addr %s2213, 8
          %s2215 = scalar_lea.vmem [#allocation2], %s2214
          %2216 = dma.done %s2212, 128
        $region60: #{encoder_layer.1} parent=55 // pred_fallthru
          _
        // Predicated region
        $region61: #{encoder_layer.1} parent=55 // pred_check
          %p2217 = pneg %p211
        $region62: #{encoder_layer.1} parent=55 // pred_check_branch
          %2219 = sbr.rel (%p2217) target = $region64
        $region63: #{encoder_layer.1} parent=55 // pred_region
          %s2220 = sand.u32 %s196, 1
          %s2221 = scalar_lea.sflag [#allocation5], %s2220
          %s2222 = sand.u32 %s196, 1
          %s2223 = smul.addr %s2222, 32
          %s2224 = scalar_lea.vmem [#allocation4], %s2223
          %2225 = dma.done %s2221, 512
        $region64: #{encoder_layer.1} parent=55 // pred_fallthru
          _
      $region56: #{encoder_layer.1} parent=5 // pred_fallthru
        _
    $region6: #{encoder_layer.1} parent=1 // loop_footer
      %s24 = sadd.s32 1, %s20
    $region7: #{encoder_layer.1} parent=1 // loop_footer_branch
      %19 = sbr.rel target = $region3
    $region8: #{encoder_layer.1} parent=1 // loop_exit
      _
    %2226 = vsyncpa [#allocation3], 1
    %s2227 = scalar_lea.sflag [#allocation3], 1
    %2228 = vsyncpa %s2227, 1
    %2229 = vsyncpa [#allocation5], 1
    %s2230 = scalar_lea.sflag [#allocation5], 1
    %2231 = vsyncpa %s2230, 1

</llo_original>
